<compile_context>
chip_gen: v5e
topology: v5e:2x2
jax: 0.10.0
libtpu: 0.0.40
codegen_flags: <defaults>
</compile_context>

<pallas_src>
import math

import jax
import jax.numpy as jnp
from jax import lax
from jax.experimental import pallas as pl
from jax.experimental.pallas import tpu as pltpu

NUM_HEADS = 12   # GPTNeoSelfAttention.forward hard-codes 12 heads
LN_EPS = 1e-5    # nn.LayerNorm default eps


def gpt_neo_attn_kernel(x_ref, wqkv_ref, wot_ref, bo_ref, gamma_ref, beta_ref,
                        o_ref):
    xt = x_ref[0]                                   # (N, C) f32, token-major
    N, C = xt.shape
    hd = C // NUM_HEADS

    # ---- fused q/k/v projection (bf16 MXU, f32 acc), channels-major result --
    # (3C, C) . (N, C)^T -> (3C, N).  1/sqrt(hd) is pre-folded into the Wq rows.
    qkv_t = lax.dot_general(
        wqkv_ref[...], xt.astype(jnp.bfloat16),
        dimension_numbers=(((1,), (1,)), ((), ())),
        preferred_element_type=jnp.float32)         # (3C, N)

    # Head split is a sublane-aligned reshape (hd is a multiple of 8 for f32).
    q_t = qkv_t[0:C, :].reshape(NUM_HEADS, hd, N)            # (H, hd, N)
    k_t = qkv_t[C:2 * C, :].reshape(NUM_HEADS, hd, N)
    v_t = qkv_t[2 * C:3 * C, :].reshape(NUM_HEADS, hd, N)

    q_h = jnp.swapaxes(q_t, 1, 2)                            # (H, N, hd)
    k_h = jnp.swapaxes(k_t, 1, 2)                            # (H, N, hd)

    # ---- causal additive mask (GPT-Neo: +1.0 allowed / -10000.0 masked) -----
    q_idx = lax.broadcasted_iota(jnp.int32, (N, N), 0)       # query index (rows)
    k_idx = lax.broadcasted_iota(jnp.int32, (N, N), 1)       # key index (cols)
    mask_add = jnp.where(q_idx >= k_idx, 1.0, -10000.0).astype(jnp.float32)

    # ---- batched attention over all 12 heads (one MXU call per contraction) --
    e = jnp.einsum('hqd,hkd->hqk', q_h, k_h,
                   preferred_element_type=jnp.float32)       # (H, N, N)
    e = e + mask_add                                         # broadcast over heads
    m = jnp.max(e, axis=-1, keepdims=True)                   # (H, N, 1)
    p = jnp.exp(e - m)
    l = jnp.sum(p, axis=-1, keepdims=True)                   # (H, N, 1)
    p = p * pl.reciprocal(l, approx=True)                    # softmax (EUP recip)

    # Context in channels-major: (H, hd, N) -> (C, N) is a free sublane merge,
    # then one small 2-D transpose makes it lane-dense for the output proj.
    ctx_t = jnp.einsum('hdk,hqk->hdq', v_t, p,
                       preferred_element_type=jnp.float32)   # (H, hd, N)
    ctx_tok = jnp.transpose(ctx_t.reshape(C, N))             # (N, C) f32

    # ---- output projection (bf16 MXU), bias, residual, LayerNorm (lane-dense)
    proj = jnp.dot(ctx_tok.astype(jnp.bfloat16), wot_ref[...],
                   preferred_element_type=jnp.float32)       # (N, C)
    y = proj + bo_ref[...] + xt                              # (N, C) f32
    mean = jnp.mean(y, axis=-1, keepdims=True)               # (N, 1)
    meansq = jnp.mean(y * y, axis=-1, keepdims=True)         # (N, 1)
    var = meansq - mean * mean                               # fused LN stats
    y_norm = (y - mean) * lax.rsqrt(var + LN_EPS)
    o_ref[0] = y_norm * gamma_ref[...] + beta_ref[...]       # 96-lane store


def prepare_params(wq, wk, wv, wo, bo, gamma, beta):
    """One-time weight prep (kept out of the per-call hot path).

    w* are PyTorch-convention (out, in) matrices.
    """
    C = wq.shape[0]
    assert C % NUM_HEADS == 0, "embed dim must be divisible by 12 heads"
    hd = C // NUM_HEADS
    assert hd % 8 == 0, "head_dim must be a multiple of the f32 sublane group (8)"
    scale = 1.0 / math.sqrt(hd)
    # Fold 1/sqrt(hd) into Wq, stack q/k/v weights, cast to bf16 once.
    w_qkv = jnp.concatenate([wq * scale, wk, wv], axis=0).astype(jnp.bfloat16)  # (3C, C)
    wo_t = jnp.transpose(wo).astype(jnp.bfloat16)                               # (C_in, C_out)
    bo_r = bo.reshape(1, C).astype(jnp.float32)
    gamma_r = gamma.reshape(1, C).astype(jnp.float32)
    beta_r = beta.reshape(1, C).astype(jnp.float32)
    return w_qkv, wo_t, bo_r, gamma_r, beta_r


@jax.jit
def gpt_neo_self_attention(x, w_qkv, wo_t, bo_r, gamma_r, beta_r):
    """x: (B, N, C) f32; remaining args come from prepare_params()."""
    B, N, C = x.shape

    row = lambda: pl.BlockSpec((1, C), lambda b: (0, 0))

    return pl.pallas_call(
        gpt_neo_attn_kernel,
        out_shape=jax.ShapeDtypeStruct((B, N, C), jnp.float32),
        grid_spec=pltpu.PrefetchScalarGridSpec(
            num_scalar_prefetch=0,
            grid=(B,),
            in_specs=[
                pl.BlockSpec((1, N, C), lambda b: (b, 0, 0)),   # x (token-major)
                pl.BlockSpec((3 * C, C), lambda b: (0, 0)),     # stacked Wqkv (bf16)
                pl.BlockSpec((C, C), lambda b: (0, 0)),         # Wo^T (bf16)
                row(), row(), row(),                            # bo, gamma, beta
            ],
            out_specs=pl.BlockSpec((1, N, C), lambda b: (b, 0, 0)),
        ),
        compiler_params=pltpu.CompilerParams(
            dimension_semantics=("parallel",)),
    )(x, w_qkv, wo_t, bo_r, gamma_r, beta_r)


def _reference(x, wq, wk, wv, wo, bo, gamma, beta):
    """Pure-JAX reference mirroring the PyTorch forward, for sanity checking."""
    B, N, C = x.shape
    hd = C // NUM_HEADS
    q = x @ wq.T
    k = x @ wk.T
    v = x @ wv.T
    q = q.reshape(B, N, NUM_HEADS, hd).transpose(0, 2, 1, 3)
    k = k.reshape(B, N, NUM_HEADS, hd).transpose(0, 2, 1, 3)
    v = v.reshape(B, N, NUM_HEADS, hd).transpose(0, 2, 1, 3)
    mask = jnp.where(jnp.tril(jnp.ones((N, N))) == 0, -10000.0, 1.0)
    energy = jnp.einsum("bhnd,bhmd->bhnm", q, k) / math.sqrt(hd) + mask
    attn = jax.nn.softmax(energy, axis=-1)
    out = jnp.einsum("bhnm,bhmd->bhnd", attn, v)
    out = out.transpose(0, 2, 1, 3).reshape(B, N, C)
    out = out @ wo.T + bo
    y = out + x
    mean = jnp.mean(y, axis=-1, keepdims=True)
    var = jnp.mean((y - mean) ** 2, axis=-1, keepdims=True)
    return (y - mean) / jnp.sqrt(var + LN_EPS) * gamma + beta


if __name__ == "__main__":
    B, N, C = 2, 16, 96   # C divisible by 12 (forward hard-codes 12 heads)

    key = jax.random.PRNGKey(0)
    kx, kq, kk, kv, ko, kb = jax.random.split(key, 6)

    x = jax.random.normal(kx, (B, N, C), dtype=jnp.float32)
    wq = 0.02 * jax.random.normal(kq, (C, C), dtype=jnp.float32)   # (out, in)
    wk = 0.02 * jax.random.normal(kk, (C, C), dtype=jnp.float32)
    wv = 0.02 * jax.random.normal(kv, (C, C), dtype=jnp.float32)
    wo = 0.02 * jax.random.normal(ko, (C, C), dtype=jnp.float32)
    bo = 0.02 * jax.random.normal(kb, (C,), dtype=jnp.float32)
    gamma = jnp.ones((C,), dtype=jnp.float32)    # nn.LayerNorm default init
    beta = jnp.zeros((C,), dtype=jnp.float32)

    # One-time prep (stacking, bf16 casts, scale folding) — not in the hot path.
    params = prepare_params(wq, wk, wv, wo, bo, gamma, beta)
    params = jax.block_until_ready(params)

    out = gpt_neo_self_attention(x, *params)
    out = jax.block_until_ready(out)

    ref = _reference(x, wq, wk, wv, wo, bo, gamma, beta)
    assert out.shape == (B, N, C)
    assert bool(jnp.all(jnp.isfinite(out)))
    assert bool(jnp.allclose(out, ref, atol=2e-2, rtol=2e-2))

    print("KERNEL_OK")
</pallas_src>

<mosaic_0001>
module attributes {stable_mosaic.version = 11 : i64} {
  func.func @gpt_neo_attn_kernel(%arg0: i32, %arg1: memref<1x16x96xf32, #tpu.memory_space<vmem>>, %arg2: memref<288x96xbf16, #tpu.memory_space<vmem>>, %arg3: memref<96x96xbf16, #tpu.memory_space<vmem>>, %arg4: memref<1x96xf32, #tpu.memory_space<vmem>>, %arg5: memref<1x96xf32, #tpu.memory_space<vmem>>, %arg6: memref<1x96xf32, #tpu.memory_space<vmem>>, %arg7: memref<1x16x96xf32, #tpu.memory_space<vmem>>) attributes {dimension_semantics = [#tpu.dimension_semantics<parallel>], iteration_bounds = array<i64: 2>, scalar_prefetch = 0 : i64, scratch_operands = 0 : i64, tpu.core_type = #tpu.core_type<tc>, window_params = [{transform_indices = @transform_0, window_bounds = array<i64: 1, 16, 96>}, {pipeline_mode = #tpu.pipeline_mode<synchronous>, transform_indices = @transform_1, window_bounds = array<i64: 288, 96>}, {pipeline_mode = #tpu.pipeline_mode<synchronous>, transform_indices = @transform_2, window_bounds = array<i64: 96, 96>}, {pipeline_mode = #tpu.pipeline_mode<synchronous>, transform_indices = @transform_3, window_bounds = array<i64: 1, 96>}, {pipeline_mode = #tpu.pipeline_mode<synchronous>, transform_indices = @transform_4, window_bounds = array<i64: 1, 96>}, {pipeline_mode = #tpu.pipeline_mode<synchronous>, transform_indices = @transform_5, window_bounds = array<i64: 1, 96>}, {transform_indices = @transform_6, window_bounds = array<i64: 1, 16, 96>}]} {
    %c0 = arith.constant 0 : index
    %c0_0 = arith.constant 0 : index
    %c0_1 = arith.constant 0 : index
    %0 = vector.load %arg1[%c0, %c0_0, %c0_1] : memref<1x16x96xf32, #tpu.memory_space<vmem>>, vector<1x16x96xf32>
    %1 = vector.shape_cast %0 : vector<1x16x96xf32> to vector<16x96xf32>
    %c0_2 = arith.constant 0 : index
    %c0_3 = arith.constant 0 : index
    %2 = vector.load %arg2[%c0_2, %c0_3] : memref<288x96xbf16, #tpu.memory_space<vmem>>, vector<288x96xbf16>
    %3 = arith.truncf %1 : vector<16x96xf32> to vector<16x96xbf16>
    %cst = arith.constant dense<0.000000e+00> : vector<288x16xf32>
    %4 = tpu.matmul %2, %3, %cst {dimension_numbers = #tpu.dot_dimension_numbers<[1], [1], [0], [0], [0, 0, 1, 0], [], []>} : vector<288x96xbf16>, vector<16x96xbf16>, vector<288x16xf32> -> vector<288x16xf32>
    %5 = vector.extract_strided_slice %4 {offsets = [0, 0], sizes = [96, 16], strides = [1, 1]} : vector<288x16xf32> to vector<96x16xf32>
    %6 = vector.shape_cast %5 : vector<96x16xf32> to vector<12x8x16xf32>
    %7 = vector.extract_strided_slice %4 {offsets = [96, 0], sizes = [96, 16], strides = [1, 1]} : vector<288x16xf32> to vector<96x16xf32>
    %8 = vector.shape_cast %7 : vector<96x16xf32> to vector<12x8x16xf32>
    %9 = vector.extract_strided_slice %4 {offsets = [192, 0], sizes = [96, 16], strides = [1, 1]} : vector<288x16xf32> to vector<96x16xf32>
    %10 = vector.shape_cast %9 : vector<96x16xf32> to vector<12x8x16xf32>
    %11 = tpu.transpose %6, [0, 2, 1] : vector<12x8x16xf32> -> vector<12x16x8xf32>
    %12 = tpu.transpose %8, [0, 2, 1] : vector<12x8x16xf32> -> vector<12x16x8xf32>
    %13 = tpu.iota {dimensions = array<i32: 0>} : vector<16x16xi32>
    %14 = tpu.iota {dimensions = array<i32: 1>} : vector<16x16xi32>
    %15 = arith.cmpi sge, %13, %14 : vector<16x16xi32>
    %cst_4 = arith.constant 1.000000e+00 : f32
    %cst_5 = arith.constant -1.000000e+04 : f32
    %16 = vector.broadcast %cst_4 : f32 to vector<16x16xf32>
    %17 = vector.broadcast %cst_5 : f32 to vector<16x16xf32>
    %18 = arith.select %15, %16, %17 : vector<16x16xi1>, vector<16x16xf32>
    "tpu.trace_start"() <{level = 10 : i32, message = "hqd,hkd->hqk"}> : () -> ()
    %cst_6 = arith.constant dense<0.000000e+00> : vector<12x16x16xf32>
    %19 = tpu.matmul %11, %12, %cst_6 {dimension_numbers = #tpu.dot_dimension_numbers<[2], [2], [1], [1], [0, 0, 0, 1, 1, 1], [0], [0]>} : vector<12x16x8xf32>, vector<12x16x8xf32>, vector<12x16x16xf32> -> vector<12x16x16xf32>
    "tpu.trace_stop"() : () -> ()
    %20 = vector.shape_cast %18 : vector<16x16xf32> to vector<1x16x16xf32>
    %21 = vector.broadcast %20 : vector<1x16x16xf32> to vector<12x16x16xf32>
    %22 = arith.addf %19, %21 : vector<12x16x16xf32>
    %cst_7 = arith.constant dense<0xFF800000> : vector<12x16xf32>
    %23 = vector.multi_reduction <maximumf>, %22, %cst_7 [2] : vector<12x16x16xf32> to vector<12x16xf32>
    %24 = vector.shape_cast %23 : vector<12x16xf32> to vector<12x16x1xf32>
    %25 = vector.broadcast %24 : vector<12x16x1xf32> to vector<12x16x16xf32>
    %26 = arith.subf %22, %25 : vector<12x16x16xf32>
    %27 = math.exp %26 : vector<12x16x16xf32>
    %cst_8 = arith.constant dense<0.000000e+00> : vector<12x16xf32>
    %28 = vector.multi_reduction <add>, %27, %cst_8 [2] : vector<12x16x16xf32> to vector<12x16xf32>
    %29 = vector.shape_cast %28 : vector<12x16xf32> to vector<12x16x1xf32>
    %30 = tpu.reciprocal %29 {approx = true} : vector<12x16x1xf32> -> vector<12x16x1xf32>
    %31 = vector.broadcast %30 : vector<12x16x1xf32> to vector<12x16x16xf32>
    %32 = arith.mulf %27, %31 : vector<12x16x16xf32>
    "tpu.trace_start"() <{level = 10 : i32, message = "hdk,hqk->hdq"}> : () -> ()
    %cst_9 = arith.constant dense<0.000000e+00> : vector<12x8x16xf32>
    %33 = tpu.matmul %10, %32, %cst_9 {dimension_numbers = #tpu.dot_dimension_numbers<[2], [2], [1], [1], [0, 0, 0, 1, 1, 1], [0], [0]>} : vector<12x8x16xf32>, vector<12x16x16xf32>, vector<12x8x16xf32> -> vector<12x8x16xf32>
    "tpu.trace_stop"() : () -> ()
    %34 = vector.shape_cast %33 : vector<12x8x16xf32> to vector<96x16xf32>
    %35 = tpu.transpose %34, [1, 0] : vector<96x16xf32> -> vector<16x96xf32>
    %36 = arith.truncf %35 : vector<16x96xf32> to vector<16x96xbf16>
    %c0_10 = arith.constant 0 : index
    %c0_11 = arith.constant 0 : index
    %37 = vector.load %arg3[%c0_10, %c0_11] : memref<96x96xbf16, #tpu.memory_space<vmem>>, vector<96x96xbf16>
    %cst_12 = arith.constant dense<0.000000e+00> : vector<16x96xf32>
    %38 = tpu.matmul %36, %37, %cst_12 {dimension_numbers = #tpu.dot_dimension_numbers<[1], [0], [0], [1], [0, 0, 1, 1], [], []>} : vector<16x96xbf16>, vector<96x96xbf16>, vector<16x96xf32> -> vector<16x96xf32>
    %c0_13 = arith.constant 0 : index
    %c0_14 = arith.constant 0 : index
    %39 = vector.load %arg4[%c0_13, %c0_14] : memref<1x96xf32, #tpu.memory_space<vmem>>, vector<1x96xf32>
    %40 = vector.broadcast %39 : vector<1x96xf32> to vector<16x96xf32>
    %41 = arith.addf %38, %40 : vector<16x96xf32>
    %42 = arith.addf %41, %1 : vector<16x96xf32>
    %cst_15 = arith.constant dense<0.000000e+00> : vector<16xf32>
    %43 = vector.multi_reduction <add>, %42, %cst_15 [1] : vector<16x96xf32> to vector<16xf32>
    %44 = vector.shape_cast %43 : vector<16xf32> to vector<16x1xf32>
    %cst_16 = arith.constant 9.600000e+01 : f32
    %45 = vector.broadcast %cst_16 : f32 to vector<16x1xf32>
    %46 = arith.divf %44, %45 : vector<16x1xf32>
    %47 = arith.mulf %42, %42 : vector<16x96xf32>
    %cst_17 = arith.constant dense<0.000000e+00> : vector<16xf32>
    %48 = vector.multi_reduction <add>, %47, %cst_17 [1] : vector<16x96xf32> to vector<16xf32>
    %49 = vector.shape_cast %48 : vector<16xf32> to vector<16x1xf32>
    %cst_18 = arith.constant 9.600000e+01 : f32
    %50 = vector.broadcast %cst_18 : f32 to vector<16x1xf32>
    %51 = arith.divf %49, %50 : vector<16x1xf32>
    %52 = arith.mulf %46, %46 : vector<16x1xf32>
    %53 = arith.subf %51, %52 : vector<16x1xf32>
    %54 = vector.broadcast %46 : vector<16x1xf32> to vector<16x96xf32>
    %55 = arith.subf %42, %54 : vector<16x96xf32>
    %cst_19 = arith.constant 9.99999974E-6 : f32
    %56 = vector.broadcast %cst_19 : f32 to vector<16x1xf32>
    %57 = arith.addf %53, %56 : vector<16x1xf32>
    %58 = math.rsqrt %57 : vector<16x1xf32>
    %59 = vector.broadcast %58 : vector<16x1xf32> to vector<16x96xf32>
    %60 = arith.mulf %55, %59 : vector<16x96xf32>
    %c0_20 = arith.constant 0 : index
    %c0_21 = arith.constant 0 : index
    %61 = vector.load %arg5[%c0_20, %c0_21] : memref<1x96xf32, #tpu.memory_space<vmem>>, vector<1x96xf32>
    %62 = vector.broadcast %61 : vector<1x96xf32> to vector<16x96xf32>
    %63 = arith.mulf %60, %62 : vector<16x96xf32>
    %c0_22 = arith.constant 0 : index
    %c0_23 = arith.constant 0 : index
    %64 = vector.load %arg6[%c0_22, %c0_23] : memref<1x96xf32, #tpu.memory_space<vmem>>, vector<1x96xf32>
    %65 = vector.broadcast %64 : vector<1x96xf32> to vector<16x96xf32>
    %66 = arith.addf %63, %65 : vector<16x96xf32>
    %c0_24 = arith.constant 0 : index
    %c0_25 = arith.constant 0 : index
    %c0_26 = arith.constant 0 : index
    %67 = vector.load %arg7[%c0_24, %c0_25, %c0_26] : memref<1x16x96xf32, #tpu.memory_space<vmem>>, vector<1x16x96xf32>
    %68 = vector.shape_cast %67 : vector<1x16x96xf32> to vector<16x96xf32>
    %69 = vector.shape_cast %66 : vector<16x96xf32> to vector<1x16x96xf32>
    tpu.vector_store %arg7[%c0_24, %c0_25, %c0_26], %69 {strides = array<i32>} : memref<1x16x96xf32, #tpu.memory_space<vmem>>, vector<1x16x96xf32>,
    return
  }
  func.func @transform_0(%arg0: i32) -> (i32, i32, i32) {
    %c0_i32 = arith.constant 0 : i32
    %c0_i32_0 = arith.constant 0 : i32
    %c0_i32_1 = arith.constant 0 : i32
    return %arg0, %c0_i32, %c0_i32_0 : i32, i32, i32
  }
  func.func @transform_1(%arg0: i32) -> (i32, i32) {
    %c0_i32 = arith.constant 0 : i32
    %c0_i32_0 = arith.constant 0 : i32
    %c0_i32_1 = arith.constant 0 : i32
    return %c0_i32, %c0_i32_0 : i32, i32
  }
  func.func @transform_2(%arg0: i32) -> (i32, i32) {
    %c0_i32 = arith.constant 0 : i32
    %c0_i32_0 = arith.constant 0 : i32
    %c0_i32_1 = arith.constant 0 : i32
    return %c0_i32, %c0_i32_0 : i32, i32
  }
  func.func @transform_3(%arg0: i32) -> (i32, i32) {
    %c0_i32 = arith.constant 0 : i32
    %c0_i32_0 = arith.constant 0 : i32
    %c0_i32_1 = arith.constant 0 : i32
    return %c0_i32, %c0_i32_0 : i32, i32
  }
  func.func @transform_4(%arg0: i32) -> (i32, i32) {
    %c0_i32 = arith.constant 0 : i32
    %c0_i32_0 = arith.constant 0 : i32
    %c0_i32_1 = arith.constant 0 : i32
    return %c0_i32, %c0_i32_0 : i32, i32
  }
  func.func @transform_5(%arg0: i32) -> (i32, i32) {
    %c0_i32 = arith.constant 0 : i32
    %c0_i32_0 = arith.constant 0 : i32
    %c0_i32_1 = arith.constant 0 : i32
    return %c0_i32, %c0_i32_0 : i32, i32
  }
  func.func @transform_6(%arg0: i32) -> (i32, i32, i32) {
    %c0_i32 = arith.constant 0 : i32
    %c0_i32_0 = arith.constant 0 : i32
    %c0_i32_1 = arith.constant 0 : i32
    return %arg0, %c0_i32, %c0_i32_0 : i32, i32, i32
  }
}

</mosaic_0001>

<llo_original>
// kernel: gpt_neo_self_attention.1
$region0: #{gpt_neo_self_attention.1}
  #allocation0 [shape = 'u32[]', space=smem, size = 0x4, offset = 0x4, fixed_abs, tag = 'smem constant byte address 0x4 - core index']
  #allocation1 [shape = 'u32[72,128]{1,0:T(1,128)}', space=vmem, size = 0x9000, scoped, tag = 'internal scratch']
  %s0 = inlined_call_operand.hbm [shape: f32[2,16,96], index: 0, kind: input, shape index: {}]
  %s1 = inlined_call_operand.hbm [shape: bf16[288,96], index: 1, kind: input, shape index: {}]
  %s2 = inlined_call_operand.hbm [shape: bf16[96,96], index: 2, kind: input, shape index: {}]
  %s3 = inlined_call_operand.vmem [shape: f32[1,96], index: 3, kind: input, shape index: {}]
  %s4 = inlined_call_operand.vmem [shape: f32[1,96], index: 4, kind: input, shape index: {}]
  %s5 = inlined_call_operand.vmem [shape: f32[1,96], index: 5, kind: input, shape index: {}]
  %s6 = inlined_call_operand.hbm [shape: f32[2,16,96], index: 6, kind: output, shape index: {}]
  %s7 = sld [smem:[#allocation0]]
  $region69: #{gpt_neo_self_attention.1} parent=0
    _
  %s9 = ssub.s32 1, %s7
  %s10 = scalar_select 0, %s9, %s7
  $region1: #{gpt_neo_self_attention.1} parent=0
    #allocation2 [shape = 'u8[16384]{0}', space=vmem, size = 0x4000, scoped, tag = 'input window, operand 0']
    #allocation3 [shape = 's32[2]{0}', space=sflag, size = 0x8, scoped, tag = 'scoped memory for gpt_neo_self_attention.1']
    #allocation4 [shape = 's32[2]{0}', space=sflag, size = 0x8, scoped, tag = 'scoped memory for gpt_neo_self_attention.1']
    #allocation5 [shape = 'u8[73728]{0}', space=vmem, size = 0x12000, scoped, tag = 'input window, operand 1, single buffered']
    #allocation6 [shape = 's32[1]{0}', space=sflag, size = 0x4, scoped, tag = 'scoped memory for gpt_neo_self_attention.1']
    #allocation7 [shape = 'u8[24576]{0}', space=vmem, size = 0x6000, scoped, tag = 'input window, operand 2, single buffered']
    #allocation8 [shape = 'u8[16384]{0}', space=vmem, size = 0x4000, scoped, tag = 'output window, operand 0']
    %11 = vsyncpa [#allocation3], 0
    %s12 = scalar_lea.sflag [#allocation3], 1
    %13 = vsyncpa %s12, 0
    %14 = vsyncpa [#allocation6], 0
    %15 = vsyncpa [#allocation4], 0
    %s16 = scalar_lea.sflag [#allocation4], 1
    %17 = vsyncpa %s16, 0
    loop: start=0, step=1, limit=4
    $region2: #{gpt_neo_self_attention.1} parent=1 // loop_pre_header
      _
    $region3: #{gpt_neo_self_attention.1} parent=1 // loop_header
      %s19 = sphi 0, %s23
      %p20 = scmp.ge.s32.totalorder %s19, 4
      %s29 = sphi 0, %s31
      %s32 = sphi 0, %s29
      %s33 = sphi 0, %s32
      %s49 = sphi 0, %s33
      %s53 = sphi 0, %s53
      %s55 = sphi 0, %s53
      %s56 = sphi 0, %s55
      %s70 = sphi 0, %s56
      %s74 = sphi 0, %s74
      %s76 = sphi 0, %s74
      %s77 = sphi 0, %s76
      %s91 = sphi 0, %s77
      %s95 = sphi 0, %s95
      %s97 = sphi 0, %s95
      %s98 = sphi 0, %s97
      %s112 = sphi 0, %s98
      %s116 = sphi 0, %s116
      %s118 = sphi 0, %s116
      %s119 = sphi 0, %s118
      %s133 = sphi 0, %s119
      %s137 = sphi 0, %s137
      %s139 = sphi 0, %s137
      %s140 = sphi 0, %s139
      %s154 = sphi 0, %s140
      %s160 = sphi 0, %s162
      %s163 = sphi 0, %s160
      %s164 = sphi 0, %s163
      %s180 = sphi 0, %s164
    $region4: #{gpt_neo_self_attention.1} parent=1 // loop_header_branch
      %22 = sbr.rel (%p20) target = $region8
    $region5: #{gpt_neo_self_attention.1} parent=1 // loop_body
      %s24 = ssub.s32 %s19, 1
      %s25 = ssub.s32 %s19, 2
      %s26 = sadd.s32 %s19, 1
      %s27 = ssub.s32 %s19, %s26
      %p28 = scmp.eq.s32.totalorder %s27, 0
      %s30 = sadd.s32 %s29, 1
      %s31 = scalar_select %p28, %s29, %s30
      %p34 = pneg %p28
      %p35 = scmp.eq.s32.totalorder %s19, 1
      %p36 = por %p34, %p35
      %p37 = scmp.ne.s32.totalorder %s29, %s32
      %p38 = scmp.eq.s32.totalorder %s19, 0
      %p39 = por %p37, %p38
      %p40 = scmp.ne.s32.totalorder %s29, %s32
      %p41 = scmp.eq.s32.totalorder %s24, 1
      %p42 = por %p40, %p41
      %p43 = scmp.ne.s32.totalorder %s32, %s33
      %p44 = scmp.eq.s32.totalorder %s24, 0
      %p45 = por %p43, %p44
      %p46 = scmp.ne.s32.totalorder %s32, %s33
      %p47 = scmp.eq.s32.totalorder %s25, 1
      %p48 = por %p46, %p47
      %p50 = scmp.ne.s32.totalorder %s33, %s49
      %p51 = scmp.eq.s32.totalorder %s25, 0
      %p52 = por %p50, %p51
      %s54 = sadd.s32 %s53, 1
      %p57 = scmp.eq.s32.totalorder %s19, 1
      %p58 = scmp.ne.s32.totalorder %s53, %s55
      %p59 = scmp.eq.s32.totalorder %s19, 0
      %p60 = por %p58, %p59
      %p61 = scmp.ne.s32.totalorder %s53, %s55
      %p62 = scmp.eq.s32.totalorder %s24, 1
      %p63 = por %p61, %p62
      %p64 = scmp.ne.s32.totalorder %s55, %s56
      %p65 = scmp.eq.s32.totalorder %s24, 0
      %p66 = por %p64, %p65
      %p67 = scmp.ne.s32.totalorder %s55, %s56
      %p68 = scmp.eq.s32.totalorder %s25, 1
      %p69 = por %p67, %p68
      %p71 = scmp.ne.s32.totalorder %s56, %s70
      %p72 = scmp.eq.s32.totalorder %s25, 0
      %p73 = por %p71, %p72
      %s75 = sadd.s32 %s74, 1
      %p78 = scmp.eq.s32.totalorder %s19, 1
      %p79 = scmp.ne.s32.totalorder %s74, %s76
      %p80 = scmp.eq.s32.totalorder %s19, 0
      %p81 = por %p79, %p80
      %p82 = scmp.ne.s32.totalorder %s74, %s76
      %p83 = scmp.eq.s32.totalorder %s24, 1
      %p84 = por %p82, %p83
      %p85 = scmp.ne.s32.totalorder %s76, %s77
      %p86 = scmp.eq.s32.totalorder %s24, 0
      %p87 = por %p85, %p86
      %p88 = scmp.ne.s32.totalorder %s76, %s77
      %p89 = scmp.eq.s32.totalorder %s25, 1
      %p90 = por %p88, %p89
      %p92 = scmp.ne.s32.totalorder %s77, %s91
      %p93 = scmp.eq.s32.totalorder %s25, 0
      %p94 = por %p92, %p93
      %s96 = sadd.s32 %s95, 1
      %p99 = scmp.eq.s32.totalorder %s19, 1
      %p100 = scmp.ne.s32.totalorder %s95, %s97
      %p101 = scmp.eq.s32.totalorder %s19, 0
      %p102 = por %p100, %p101
      %p103 = scmp.ne.s32.totalorder %s95, %s97
      %p104 = scmp.eq.s32.totalorder %s24, 1
      %p105 = por %p103, %p104
      %p106 = scmp.ne.s32.totalorder %s97, %s98
      %p107 = scmp.eq.s32.totalorder %s24, 0
      %p108 = por %p106, %p107
      %p109 = scmp.ne.s32.totalorder %s97, %s98
      %p110 = scmp.eq.s32.totalorder %s25, 1
      %p111 = por %p109, %p110
      %p113 = scmp.ne.s32.totalorder %s98, %s112
      %p114 = scmp.eq.s32.totalorder %s25, 0
      %p115 = por %p113, %p114
      %s117 = sadd.s32 %s116, 1
      %p120 = scmp.eq.s32.totalorder %s19, 1
      %p121 = scmp.ne.s32.totalorder %s116, %s118
      %p122 = scmp.eq.s32.totalorder %s19, 0
      %p123 = por %p121, %p122
      %p124 = scmp.ne.s32.totalorder %s116, %s118
      %p125 = scmp.eq.s32.totalorder %s24, 1
      %p126 = por %p124, %p125
      %p127 = scmp.ne.s32.totalorder %s118, %s119
      %p128 = scmp.eq.s32.totalorder %s24, 0
      %p129 = por %p127, %p128
      %p130 = scmp.ne.s32.totalorder %s118, %s119
      %p131 = scmp.eq.s32.totalorder %s25, 1
      %p132 = por %p130, %p131
      %p134 = scmp.ne.s32.totalorder %s119, %s133
      %p135 = scmp.eq.s32.totalorder %s25, 0
      %p136 = por %p134, %p135
      %s138 = sadd.s32 %s137, 1
      %p141 = scmp.eq.s32.totalorder %s19, 1
      %p142 = scmp.ne.s32.totalorder %s137, %s139
      %p143 = scmp.eq.s32.totalorder %s19, 0
      %p144 = por %p142, %p143
      %p145 = scmp.ne.s32.totalorder %s137, %s139
      %p146 = scmp.eq.s32.totalorder %s24, 1
      %p147 = por %p145, %p146
      %p148 = scmp.ne.s32.totalorder %s139, %s140
      %p149 = scmp.eq.s32.totalorder %s24, 0
      %p150 = por %p148, %p149
      %p151 = scmp.ne.s32.totalorder %s139, %s140
      %p152 = scmp.eq.s32.totalorder %s25, 1
      %p153 = por %p151, %p152
      %p155 = scmp.ne.s32.totalorder %s140, %s154
      %p156 = scmp.eq.s32.totalorder %s25, 0
      %p157 = por %p155, %p156
      %s158 = ssub.s32 %s19, %s26
      %p159 = scmp.eq.s32.totalorder %s158, 0
      %s161 = sadd.s32 %s160, 1
      %s162 = scalar_select %p159, %s160, %s161
      %p165 = pneg %p159
      %p166 = scmp.eq.s32.totalorder %s19, 1
      %p167 = por %p165, %p166
      %p168 = scmp.ne.s32.totalorder %s160, %s163
      %p169 = scmp.eq.s32.totalorder %s19, 0
      %p170 = por %p168, %p169
      %p171 = scmp.ne.s32.totalorder %s160, %s163
      %p172 = scmp.eq.s32.totalorder %s24, 1
      %p173 = por %p171, %p172
      %p174 = scmp.ne.s32.totalorder %s163, %s164
      %p175 = scmp.eq.s32.totalorder %s24, 0
      %p176 = por %p174, %p175
      %p177 = scmp.ne.s32.totalorder %s163, %s164
      %p178 = scmp.eq.s32.totalorder %s25, 1
      %p179 = por %p177, %p178
      %p181 = scmp.ne.s32.totalorder %s164, %s180
      %p182 = scmp.eq.s32.totalorder %s25, 0
      %p183 = por %p181, %p182
      %p184 = scmp.le.s32.totalorder 1, %s19
      %p185 = scmp.lt.s32.totalorder %s19, 3
      %p186 = pnand %p184, %p185
      %p187 = pneg %p186
      // Predicated region
      $region9: #{gpt_neo_self_attention.1} parent=5 // pred_check
        _
      $region10: #{gpt_neo_self_attention.1} parent=5 // pred_check_branch
        %189 = sbr.rel (%p186) target = $region12
      $region11: #{gpt_neo_self_attention.1} parent=5 // pred_region
        %s190 = ssub.s32 %s19, 1
        // Predicated region
        $region13: #{gpt_neo_self_attention.1} parent=11 // pred_check
          %p191 = pneg %p66
        $region14: #{gpt_neo_self_attention.1} parent=11 // pred_check_branch
          %193 = sbr.rel (%p191) target = $region16
        $region15: #{gpt_neo_self_attention.1} parent=11 // pred_region
          %195 = vsyncadd [#allocation6], 0
          %s196 = sshll.u32 %s1, 4
          %s197 = int_to_ptr.hbm [resolvable:$true] %s196
          %s198 = sshll.u32 [#allocation5], 4
          %s199 = int_to_ptr.vmem [resolvable:$true] %s198
          %204 = dma.hbm_to_vmem [thread:$0]  %s197, 2304, %s199, [#allocation6], 64, 64, 4
        $region16: #{gpt_neo_self_attention.1} parent=11 // pred_fallthru
          _
        // Predicated region
        $region17: #{gpt_neo_self_attention.1} parent=11 // pred_check
          %p205 = pneg %p87
        $region18: #{gpt_neo_self_attention.1} parent=11 // pred_check_branch
          %207 = sbr.rel (%p205) target = $region20
        $region19: #{gpt_neo_self_attention.1} parent=11 // pred_region
          %209 = vsyncadd [#allocation6], 0
          %s210 = sshll.u32 %s2, 4
          %s211 = int_to_ptr.hbm [resolvable:$true] %s210
          %s212 = sshll.u32 [#allocation7], 4
          %s213 = int_to_ptr.vmem [resolvable:$true] %s212
          %218 = dma.hbm_to_vmem [thread:$0]  %s211, 768, %s213, [#allocation6], 64, 64, 4
        $region20: #{gpt_neo_self_attention.1} parent=11 // pred_fallthru
          _
        // Predicated region
        $region21: #{gpt_neo_self_attention.1} parent=11 // pred_check
          %p219 = pneg %p108
        $region22: #{gpt_neo_self_attention.1} parent=11 // pred_check_branch
          %221 = sbr.rel (%p219) target = $region24
        $region23: #{gpt_neo_self_attention.1} parent=11 // pred_region
          _
        $region24: #{gpt_neo_self_attention.1} parent=11 // pred_fallthru
          _
        // Predicated region
        $region25: #{gpt_neo_self_attention.1} parent=11 // pred_check
          %p222 = pneg %p129
        $region26: #{gpt_neo_self_attention.1} parent=11 // pred_check_branch
          %224 = sbr.rel (%p222) target = $region28
        $region27: #{gpt_neo_self_attention.1} parent=11 // pred_region
          _
        $region28: #{gpt_neo_self_attention.1} parent=11 // pred_fallthru
          _
        // Predicated region
        $region29: #{gpt_neo_self_attention.1} parent=11 // pred_check
          %p225 = pneg %p150
        $region30: #{gpt_neo_self_attention.1} parent=11 // pred_check_branch
          %227 = sbr.rel (%p225) target = $region32
        $region31: #{gpt_neo_self_attention.1} parent=11 // pred_region
          _
        $region32: #{gpt_neo_self_attention.1} parent=11 // pred_fallthru
          _
      $region12: #{gpt_neo_self_attention.1} parent=5 // pred_fallthru
        _
      %p228 = scmp.lt.s32.totalorder %s19, 2
      // Predicated region
      $region33: #{gpt_neo_self_attention.1} parent=5 // pred_check
        %p229 = pneg %p228
      $region34: #{gpt_neo_self_attention.1} parent=5 // pred_check_branch
        %231 = sbr.rel (%p229) target = $region36
      $region35: #{gpt_neo_self_attention.1} parent=5 // pred_region
        // Predicated region
        $region37: #{gpt_neo_self_attention.1} parent=35 // pred_check
          %p232 = pneg %p39
        $region38: #{gpt_neo_self_attention.1} parent=35 // pred_check_branch
          %234 = sbr.rel (%p232) target = $region40
        $region39: #{gpt_neo_self_attention.1} parent=35 // pred_region
          %s235 = sand.u32 %s29, 1
          %s236 = scalar_lea.sflag [#allocation3], %s235
          %s237 = sand.u32 %s29, 1
          %s238 = smul.addr %s237, 16
          %s239 = scalar_lea.vmem [#allocation2], %s238
          %241 = vsyncadd %s236, 0
          %s242 = smul.addr %s19, 2
          %s243 = smul.addr %s242, 8
          %s244 = scalar_lea.hbm %s0, %s243
          %s245 = sshll.u32 %s244, 4
          %s246 = int_to_ptr.hbm [resolvable:$true] %s245
          %s247 = sshll.u32 %s239, 4
          %s248 = int_to_ptr.vmem [resolvable:$true] %s247
          %253 = dma.hbm_to_vmem [thread:$0]  %s246, 256, %s248, %s236, 128, 128, 8
        $region40: #{gpt_neo_self_attention.1} parent=35 // pred_fallthru
          _
      $region36: #{gpt_neo_self_attention.1} parent=5 // pred_fallthru
        _
      %p254 = scmp.le.s32.totalorder 1, %s19
      %p255 = scmp.lt.s32.totalorder %s19, 3
      %p256 = pnand %p254, %p255
      %p257 = pneg %p256
      // Predicated region
      $region41: #{gpt_neo_self_attention.1} parent=5 // pred_check
        _
      $region42: #{gpt_neo_self_attention.1} parent=5 // pred_check_branch
        %259 = sbr.rel (%p256) target = $region44
      $region43: #{gpt_neo_self_attention.1} parent=5 // pred_region
        %s260 = ssub.s32 %s19, 1
        %s261 = sand.u32 %s32, 1
        %s262 = scalar_lea.sflag [#allocation3], %s261
        %s263 = sand.u32 %s32, 1
        %s264 = smul.addr %s263, 16
        %s265 = scalar_lea.vmem [#allocation2], %s264
        // Predicated region
        $region45: #{gpt_neo_self_attention.1} parent=43 // pred_check
          %p266 = pneg %p45
        $region46: #{gpt_neo_self_attention.1} parent=43 // pred_check_branch
          %268 = sbr.rel (%p266) target = $region48
        $region47: #{gpt_neo_self_attention.1} parent=43 // pred_region
          %270 = dma.done %s262, 256
        $region48: #{gpt_neo_self_attention.1} parent=43 // pred_fallthru
          _
        // Predicated region
        $region49: #{gpt_neo_self_attention.1} parent=43 // pred_check
          %p271 = pneg %p66
        $region50: #{gpt_neo_self_attention.1} parent=43 // pred_check_branch
          %273 = sbr.rel (%p271) target = $region52
        $region51: #{gpt_neo_self_attention.1} parent=43 // pred_region
          %275 = dma.done [#allocation6], 2304
        $region52: #{gpt_neo_self_attention.1} parent=43 // pred_fallthru
          _
        // Predicated region
        $region53: #{gpt_neo_self_attention.1} parent=43 // pred_check
          %p276 = pneg %p87
        $region54: #{gpt_neo_self_attention.1} parent=43 // pred_check_branch
          %278 = sbr.rel (%p276) target = $region56
        $region55: #{gpt_neo_self_attention.1} parent=43 // pred_region
          %280 = dma.done [#allocation6], 768
        $region56: #{gpt_neo_self_attention.1} parent=43 // pred_fallthru
          _
        %s281 = sand.u32 %s32, 1
        %s282 = scalar_lea.sflag [#allocation3], %s281
        %s283 = sand.u32 %s32, 1
        %s284 = smul.addr %s283, 16
        %s285 = scalar_lea.vmem [#allocation2], %s284
        %p286 = pneg %p45
        %p287 = pneg %p42
        %p288 = pneg %p66
        %p289 = pneg %p63
        %p290 = pneg %p87
        %p291 = pneg %p84
        %p292 = pneg %p108
        %p293 = pneg %p105
        %p294 = pneg %p129
        %p295 = pneg %p126
        %p296 = pneg %p150
        %p297 = pneg %p147
        %p298 = pneg %p176
        %p299 = pneg %p173
        %s300 = sand.u32 %s163, 1
        %s301 = scalar_lea.sflag [#allocation4], %s300
        %s302 = sand.u32 %s163, 1
        %s303 = smul.addr %s302, 16
        %s304 = scalar_lea.vmem [#allocation8], %s303
        %v306 = vld [vmem:[%s265] sm:$0xff]
        %v307 = vld [vmem:[%s265 + $0x8] sm:$0xff]
        %v308 = vld [vmem:[#allocation5] sm:$0xf]
        %v309 = vld [vmem:[#allocation5 + $0x4] sm:$0xf]
        %v310 = vld [vmem:[#allocation5 + $0x8] sm:$0xf]
        %v311 = vld [vmem:[#allocation5 + $0xc] sm:$0xf]
        %v312 = vld [vmem:[#allocation5 + $0x10] sm:$0xf]
        %v313 = vld [vmem:[#allocation5 + $0x14] sm:$0xf]
        %v314 = vld [vmem:[#allocation5 + $0x18] sm:$0xf]
        %v315 = vld [vmem:[#allocation5 + $0x1c] sm:$0xf]
        %v316 = vld [vmem:[#allocation5 + $0x20] sm:$0xf]
        %v317 = vld [vmem:[#allocation5 + $0x24] sm:$0xf]
        %v318 = vld [vmem:[#allocation5 + $0x28] sm:$0xf]
        %v319 = vld [vmem:[#allocation5 + $0x2c] sm:$0xf]
        %v320 = vld [vmem:[#allocation5 + $0x30] sm:$0xf]
        %v321 = vld [vmem:[#allocation5 + $0x34] sm:$0xf]
        %v322 = vld [vmem:[#allocation5 + $0x38] sm:$0xf]
        %v323 = vld [vmem:[#allocation5 + $0x3c] sm:$0xf]
        %v324 = vld [vmem:[#allocation5 + $0x40] sm:$0xf]
        %v325 = vld [vmem:[#allocation5 + $0x44] sm:$0xf]
        %v326 = vld [vmem:[#allocation5 + $0x48] sm:$0xf]
        %v327 = vld [vmem:[#allocation5 + $0x4c] sm:$0xf]
        %v328 = vld [vmem:[#allocation5 + $0x50] sm:$0xf]
        %v329 = vld [vmem:[#allocation5 + $0x54] sm:$0xf]
        %v330 = vld [vmem:[#allocation5 + $0x58] sm:$0xf]
        %v331 = vld [vmem:[#allocation5 + $0x5c] sm:$0xf]
        %v332 = vld [vmem:[#allocation5 + $0x60] sm:$0xf]
        %v333 = vld [vmem:[#allocation5 + $0x64] sm:$0xf]
        %v334 = vld [vmem:[#allocation5 + $0x68] sm:$0xf]
        %v335 = vld [vmem:[#allocation5 + $0x6c] sm:$0xf]
        %v336 = vld [vmem:[#allocation5 + $0x70] sm:$0xf]
        %v337 = vld [vmem:[#allocation5 + $0x74] sm:$0xf]
        %v338 = vld [vmem:[#allocation5 + $0x78] sm:$0xf]
        %v339 = vld [vmem:[#allocation5 + $0x7c] sm:$0xf]
        %v340 = vld [vmem:[#allocation5 + $0x80] sm:$0xf]
        %v341 = vld [vmem:[#allocation5 + $0x84] sm:$0xf]
        %v342 = vld [vmem:[#allocation5 + $0x88] sm:$0xf]
        %v343 = vld [vmem:[#allocation5 + $0x8c] sm:$0xf]
        %v344 = vpack.c.bf16 %v307, %v306
        %v381 = vunpack.c.l.b16 %v308
        %v382 = vunpack.c.l.b16 %v309
        %v383 = vunpack.c.l.b16 %v310
        %v384 = vunpack.c.l.b16 %v311
        %v385 = vunpack.c.l.b16 %v312
        %v386 = vunpack.c.l.b16 %v313
        %v387 = vunpack.c.l.b16 %v314
        %v388 = vunpack.c.l.b16 %v315
        %v389 = vunpack.c.l.b16 %v316
        %v390 = vunpack.c.l.b16 %v317
        %v391 = vunpack.c.l.b16 %v318
        %v392 = vunpack.c.l.b16 %v319
        %v393 = vunpack.c.l.b16 %v320
        %v394 = vunpack.c.l.b16 %v321
        %v395 = vunpack.c.l.b16 %v322
        %v396 = vunpack.c.l.b16 %v323
        %v397 = vunpack.c.l.b16 %v324
        %v398 = vunpack.c.l.b16 %v325
        %v399 = vunpack.c.l.b16 %v326
        %v400 = vunpack.c.l.b16 %v327
        %v401 = vunpack.c.l.b16 %v328
        %v402 = vunpack.c.l.b16 %v329
        %v403 = vunpack.c.l.b16 %v330
        %v404 = vunpack.c.l.b16 %v331
        %v405 = vunpack.c.l.b16 %v332
        %v406 = vunpack.c.l.b16 %v333
        %v407 = vunpack.c.l.b16 %v334
        %v408 = vunpack.c.l.b16 %v335
        %v409 = vunpack.c.l.b16 %v336
        %v410 = vunpack.c.l.b16 %v337
        %v411 = vunpack.c.l.b16 %v338
        %v412 = vunpack.c.l.b16 %v339
        %v413 = vunpack.c.l.b16 %v340
        %v414 = vunpack.c.l.b16 %v341
        %v415 = vunpack.c.l.b16 %v342
        %v416 = vunpack.c.l.b16 %v343
        %v417 = vpack.c.b16 %v382, %v381
        %v418 = vpack.c.b16 %v384, %v383
        %v419 = vpack.c.b16 %v386, %v385
        %v420 = vpack.c.b16 %v388, %v387
        %v421 = vpack.c.b16 %v390, %v389
        %v422 = vpack.c.b16 %v392, %v391
        %v423 = vpack.c.b16 %v394, %v393
        %v424 = vpack.c.b16 %v396, %v395
        %v425 = vpack.c.b16 %v398, %v397
        %v426 = vpack.c.b16 %v400, %v399
        %v427 = vpack.c.b16 %v402, %v401
        %v428 = vpack.c.b16 %v404, %v403
        %v429 = vpack.c.b16 %v406, %v405
        %v430 = vpack.c.b16 %v408, %v407
        %v431 = vpack.c.b16 %v410, %v409
        %v432 = vpack.c.b16 %v412, %v411
        %v433 = vpack.c.b16 %v414, %v413
        %v434 = vpack.c.b16 %v416, %v415
        %vm435 = vcmask 785408
        %v437 = vsel %vm435, %v417, 0
        %v440 = vsel %vm435, %v418, 0
        %v443 = vsel %vm435, %v419, 0
        %v446 = vsel %vm435, %v420, 0
        %v449 = vsel %vm435, %v421, 0
        %v452 = vsel %vm435, %v422, 0
        %v455 = vsel %vm435, %v423, 0
        %v458 = vsel %vm435, %v424, 0
        %v461 = vsel %vm435, %v425, 0
        %v464 = vsel %vm435, %v426, 0
        %v467 = vsel %vm435, %v427, 0
        %v470 = vsel %vm435, %v428, 0
        %v473 = vsel %vm435, %v429, 0
        %v476 = vsel %vm435, %v430, 0
        %v479 = vsel %vm435, %v431, 0
        %v482 = vsel %vm435, %v432, 0
        %v485 = vsel %vm435, %v433, 0
        %v488 = vsel %vm435, %v434, 0
        %v491 = vsel %vm435, %v344, 0
        %493 = vmatpush.bf16.xpose.msra.mxu0 0
        %494 = vmatpush.bf16.xpose.msra.mxu0 0
        %495 = vmatpush.bf16.xpose.msra.mxu0 0
        %496 = vmatpush.bf16.xpose.msra.mxu0 0
        %497 = vmatpush.bf16.xpose.msra.mxu0 0
        %498 = vmatpush.bf16.xpose.msra.mxu0 0
        %499 = vmatpush.bf16.xpose.msra.mxu0 0
        %500 = vmatpush.bf16.xpose.msra.mxu0 %v491
        %501 = vmatmul.bf16.gmra.mxu0 %v437
        %v502 = vpop.f32.mrf.mxu0
        %v503 = vadd.f32 0.0, %v502
        %v504 = vpop.f32.mrf.mxu0
        %v505 = vadd.f32 0.0, %v504
        %506 = vmatmul.bf16.gmra.mxu0 %v440
        %v507 = vpop.f32.mrf.mxu0
        %v508 = vadd.f32 0.0, %v507
        %v509 = vpop.f32.mrf.mxu0
        %v510 = vadd.f32 0.0, %v509
        %511 = vmatmul.bf16.gmra.mxu0 %v443
        %v512 = vpop.f32.mrf.mxu0
        %v513 = vadd.f32 0.0, %v512
        %v514 = vpop.f32.mrf.mxu0
        %v515 = vadd.f32 0.0, %v514
        %516 = vmatmul.bf16.gmra.mxu0 %v446
        %v517 = vpop.f32.mrf.mxu0
        %v518 = vadd.f32 0.0, %v517
        %v519 = vpop.f32.mrf.mxu0
        %v520 = vadd.f32 0.0, %v519
        %521 = vmatmul.bf16.gmra.mxu0 %v449
        %v522 = vpop.f32.mrf.mxu0
        %v523 = vadd.f32 0.0, %v522
        %v524 = vpop.f32.mrf.mxu0
        %v525 = vadd.f32 0.0, %v524
        %526 = vmatmul.bf16.gmra.mxu0 %v452
        %v527 = vpop.f32.mrf.mxu0
        %v528 = vadd.f32 0.0, %v527
        %v529 = vpop.f32.mrf.mxu0
        %v530 = vadd.f32 0.0, %v529
        %531 = vmatmul.bf16.gmra.mxu0 %v455
        %v532 = vpop.f32.mrf.mxu0
        %v533 = vadd.f32 0.0, %v532
        %v534 = vpop.f32.mrf.mxu0
        %v535 = vadd.f32 0.0, %v534
        %536 = vmatmul.bf16.gmra.mxu0 %v458
        %v537 = vpop.f32.mrf.mxu0
        %v538 = vadd.f32 0.0, %v537
        %v539 = vpop.f32.mrf.mxu0
        %v540 = vadd.f32 0.0, %v539
        %541 = vmatmul.bf16.gmra.mxu0 %v461
        %v542 = vpop.f32.mrf.mxu0
        %v543 = vadd.f32 0.0, %v542
        %v544 = vpop.f32.mrf.mxu0
        %v545 = vadd.f32 0.0, %v544
        %546 = vmatmul.bf16.gmra.mxu0 %v464
        %v547 = vpop.f32.mrf.mxu0
        %v548 = vadd.f32 0.0, %v547
        %v549 = vpop.f32.mrf.mxu0
        %v550 = vadd.f32 0.0, %v549
        %551 = vmatmul.bf16.gmra.mxu0 %v467
        %v552 = vpop.f32.mrf.mxu0
        %v553 = vadd.f32 0.0, %v552
        %v554 = vpop.f32.mrf.mxu0
        %v555 = vadd.f32 0.0, %v554
        %556 = vmatmul.bf16.gmra.mxu0 %v470
        %v557 = vpop.f32.mrf.mxu0
        %v558 = vadd.f32 0.0, %v557
        %v559 = vpop.f32.mrf.mxu0
        %v560 = vadd.f32 0.0, %v559
        %561 = vmatmul.bf16.gmra.mxu0 %v473
        %v562 = vpop.f32.mrf.mxu0
        %v563 = vadd.f32 0.0, %v562
        %v564 = vpop.f32.mrf.mxu0
        %v565 = vadd.f32 0.0, %v564
        %566 = vmatmul.bf16.gmra.mxu0 %v476
        %v567 = vpop.f32.mrf.mxu0
        %v568 = vadd.f32 0.0, %v567
        %v569 = vpop.f32.mrf.mxu0
        %v570 = vadd.f32 0.0, %v569
        %571 = vmatmul.bf16.gmra.mxu0 %v479
        %v572 = vpop.f32.mrf.mxu0
        %v573 = vadd.f32 0.0, %v572
        %v574 = vpop.f32.mrf.mxu0
        %v575 = vadd.f32 0.0, %v574
        %576 = vmatmul.bf16.gmra.mxu0 %v482
        %v577 = vpop.f32.mrf.mxu0
        %v578 = vadd.f32 0.0, %v577
        %v579 = vpop.f32.mrf.mxu0
        %v580 = vadd.f32 0.0, %v579
        %581 = vmatmul.bf16.gmra.mxu0 %v485
        %v582 = vpop.f32.mrf.mxu0
        %v583 = vadd.f32 0.0, %v582
        %v584 = vpop.f32.mrf.mxu0
        %v585 = vadd.f32 0.0, %v584
        %586 = vmatmul.bf16.gmra.mxu0 %v488
        %v587 = vpop.f32.mrf.mxu0
        %v588 = vadd.f32 0.0, %v587
        %v589 = vpop.f32.mrf.mxu0
        %v590 = vadd.f32 0.0, %v589
        %591 = vdwg.mxu0
        %592 = vxpose.xlu0.b32.start [1/16] %v503, 128
        %593 = vxpose.xlu0.b32.cont [2/16] 0.0, 128
        %594 = vxpose.xlu0.b32.cont [3/16] 0.0, 128
        %595 = vxpose.xlu0.b32.cont [4/16] 0.0, 128
        %596 = vxpose.xlu0.b32.cont [5/16] 0.0, 128
        %597 = vxpose.xlu0.b32.cont [6/16] 0.0, 128
        %598 = vxpose.xlu0.b32.cont [7/16] 0.0, 128
        %599 = vxpose.xlu0.b32.cont [8/16] 0.0, 128
        %600 = vxpose.xlu0.b32.cont [9/16] 0.0, 128
        %601 = vxpose.xlu0.b32.cont [10/16] 0.0, 128
        %602 = vxpose.xlu0.b32.cont [11/16] 0.0, 128
        %603 = vxpose.xlu0.b32.cont [12/16] 0.0, 128
        %604 = vxpose.xlu0.b32.cont [13/16] 0.0, 128
        %605 = vxpose.xlu0.b32.cont [14/16] 0.0, 128
        %606 = vxpose.xlu0.b32.cont [15/16] 0.0, 128
        %607 = vxpose.xlu0.b32.end [16/16] 0.0, 128
        %v608 = vpop.trf.xlu0
        %v609 = vpop.trf.xlu0
        %v610 = vpop.trf.xlu0
        %v611 = vpop.trf.xlu0
        %v612 = vpop.trf.xlu0
        %v613 = vpop.trf.xlu0
        %v614 = vpop.trf.xlu0
        %v615 = vpop.trf.xlu0
        %v616 = vpop.trf.xlu0
        %v617 = vpop.trf.xlu0
        %v618 = vpop.trf.xlu0
        %v619 = vpop.trf.xlu0
        %v620 = vpop.trf.xlu0
        %v621 = vpop.trf.xlu0
        %v622 = vpop.trf.xlu0
        %v623 = vpop.trf.xlu0
        %624 = vxpose.xlu0.b32.start [1/16] %v505, 128
        %625 = vxpose.xlu0.b32.cont [2/16] 0.0, 128
        %626 = vxpose.xlu0.b32.cont [3/16] 0.0, 128
        %627 = vxpose.xlu0.b32.cont [4/16] 0.0, 128
        %628 = vxpose.xlu0.b32.cont [5/16] 0.0, 128
        %629 = vxpose.xlu0.b32.cont [6/16] 0.0, 128
        %630 = vxpose.xlu0.b32.cont [7/16] 0.0, 128
        %631 = vxpose.xlu0.b32.cont [8/16] 0.0, 128
        %632 = vxpose.xlu0.b32.cont [9/16] 0.0, 128
        %633 = vxpose.xlu0.b32.cont [10/16] 0.0, 128
        %634 = vxpose.xlu0.b32.cont [11/16] 0.0, 128
        %635 = vxpose.xlu0.b32.cont [12/16] 0.0, 128
        %636 = vxpose.xlu0.b32.cont [13/16] 0.0, 128
        %637 = vxpose.xlu0.b32.cont [14/16] 0.0, 128
        %638 = vxpose.xlu0.b32.cont [15/16] 0.0, 128
        %639 = vxpose.xlu0.b32.end [16/16] 0.0, 128
        %v640 = vpop.trf.xlu0
        %v641 = vpop.trf.xlu0
        %v642 = vpop.trf.xlu0
        %v643 = vpop.trf.xlu0
        %v644 = vpop.trf.xlu0
        %v645 = vpop.trf.xlu0
        %v646 = vpop.trf.xlu0
        %v647 = vpop.trf.xlu0
        %v648 = vpop.trf.xlu0
        %v649 = vpop.trf.xlu0
        %v650 = vpop.trf.xlu0
        %v651 = vpop.trf.xlu0
        %v652 = vpop.trf.xlu0
        %v653 = vpop.trf.xlu0
        %v654 = vpop.trf.xlu0
        %v655 = vpop.trf.xlu0
        %656 = vxpose.xlu0.b32.start [1/16] %v508, 128
        %657 = vxpose.xlu0.b32.cont [2/16] 0.0, 128
        %658 = vxpose.xlu0.b32.cont [3/16] 0.0, 128
        %659 = vxpose.xlu0.b32.cont [4/16] 0.0, 128
        %660 = vxpose.xlu0.b32.cont [5/16] 0.0, 128
        %661 = vxpose.xlu0.b32.cont [6/16] 0.0, 128
        %662 = vxpose.xlu0.b32.cont [7/16] 0.0, 128
        %663 = vxpose.xlu0.b32.cont [8/16] 0.0, 128
        %664 = vxpose.xlu0.b32.cont [9/16] 0.0, 128
        %665 = vxpose.xlu0.b32.cont [10/16] 0.0, 128
        %666 = vxpose.xlu0.b32.cont [11/16] 0.0, 128
        %667 = vxpose.xlu0.b32.cont [12/16] 0.0, 128
        %668 = vxpose.xlu0.b32.cont [13/16] 0.0, 128
        %669 = vxpose.xlu0.b32.cont [14/16] 0.0, 128
        %670 = vxpose.xlu0.b32.cont [15/16] 0.0, 128
        %671 = vxpose.xlu0.b32.end [16/16] 0.0, 128
        %v672 = vpop.trf.xlu0
        %v673 = vpop.trf.xlu0
        %v674 = vpop.trf.xlu0
        %v675 = vpop.trf.xlu0
        %v676 = vpop.trf.xlu0
        %v677 = vpop.trf.xlu0
        %v678 = vpop.trf.xlu0
        %v679 = vpop.trf.xlu0
        %v680 = vpop.trf.xlu0
        %v681 = vpop.trf.xlu0
        %v682 = vpop.trf.xlu0
        %v683 = vpop.trf.xlu0
        %v684 = vpop.trf.xlu0
        %v685 = vpop.trf.xlu0
        %v686 = vpop.trf.xlu0
        %v687 = vpop.trf.xlu0
        %688 = vxpose.xlu0.b32.start [1/16] %v510, 128
        %689 = vxpose.xlu0.b32.cont [2/16] 0.0, 128
        %690 = vxpose.xlu0.b32.cont [3/16] 0.0, 128
        %691 = vxpose.xlu0.b32.cont [4/16] 0.0, 128
        %692 = vxpose.xlu0.b32.cont [5/16] 0.0, 128
        %693 = vxpose.xlu0.b32.cont [6/16] 0.0, 128
        %694 = vxpose.xlu0.b32.cont [7/16] 0.0, 128
        %695 = vxpose.xlu0.b32.cont [8/16] 0.0, 128
        %696 = vxpose.xlu0.b32.cont [9/16] 0.0, 128
        %697 = vxpose.xlu0.b32.cont [10/16] 0.0, 128
        %698 = vxpose.xlu0.b32.cont [11/16] 0.0, 128
        %699 = vxpose.xlu0.b32.cont [12/16] 0.0, 128
        %700 = vxpose.xlu0.b32.cont [13/16] 0.0, 128
        %701 = vxpose.xlu0.b32.cont [14/16] 0.0, 128
        %702 = vxpose.xlu0.b32.cont [15/16] 0.0, 128
        %703 = vxpose.xlu0.b32.end [16/16] 0.0, 128
        %v704 = vpop.trf.xlu0
        %v705 = vpop.trf.xlu0
        %v706 = vpop.trf.xlu0
        %v707 = vpop.trf.xlu0
        %v708 = vpop.trf.xlu0
        %v709 = vpop.trf.xlu0
        %v710 = vpop.trf.xlu0
        %v711 = vpop.trf.xlu0
        %v712 = vpop.trf.xlu0
        %v713 = vpop.trf.xlu0
        %v714 = vpop.trf.xlu0
        %v715 = vpop.trf.xlu0
        %v716 = vpop.trf.xlu0
        %v717 = vpop.trf.xlu0
        %v718 = vpop.trf.xlu0
        %v719 = vpop.trf.xlu0
        %720 = vxpose.xlu0.b32.start [1/16] %v513, 128
        %721 = vxpose.xlu0.b32.cont [2/16] 0.0, 128
        %722 = vxpose.xlu0.b32.cont [3/16] 0.0, 128
        %723 = vxpose.xlu0.b32.cont [4/16] 0.0, 128
        %724 = vxpose.xlu0.b32.cont [5/16] 0.0, 128
        %725 = vxpose.xlu0.b32.cont [6/16] 0.0, 128
        %726 = vxpose.xlu0.b32.cont [7/16] 0.0, 128
        %727 = vxpose.xlu0.b32.cont [8/16] 0.0, 128
        %728 = vxpose.xlu0.b32.cont [9/16] 0.0, 128
        %729 = vxpose.xlu0.b32.cont [10/16] 0.0, 128
        %730 = vxpose.xlu0.b32.cont [11/16] 0.0, 128
        %731 = vxpose.xlu0.b32.cont [12/16] 0.0, 128
        %732 = vxpose.xlu0.b32.cont [13/16] 0.0, 128
        %733 = vxpose.xlu0.b32.cont [14/16] 0.0, 128
        %734 = vxpose.xlu0.b32.cont [15/16] 0.0, 128
        %735 = vxpose.xlu0.b32.end [16/16] 0.0, 128
        %v736 = vpop.trf.xlu0
        %v737 = vpop.trf.xlu0
        %v738 = vpop.trf.xlu0
        %v739 = vpop.trf.xlu0
        %v740 = vpop.trf.xlu0
        %v741 = vpop.trf.xlu0
        %v742 = vpop.trf.xlu0
        %v743 = vpop.trf.xlu0
        %v744 = vpop.trf.xlu0
        %v745 = vpop.trf.xlu0
        %v746 = vpop.trf.xlu0
        %v747 = vpop.trf.xlu0
        %v748 = vpop.trf.xlu0
        %v749 = vpop.trf.xlu0
        %v750 = vpop.trf.xlu0
        %v751 = vpop.trf.xlu0
        %752 = vxpose.xlu0.b32.start [1/16] %v515, 128
        %753 = vxpose.xlu0.b32.cont [2/16] 0.0, 128
        %754 = vxpose.xlu0.b32.cont [3/16] 0.0, 128
        %755 = vxpose.xlu0.b32.cont [4/16] 0.0, 128
        %756 = vxpose.xlu0.b32.cont [5/16] 0.0, 128
        %757 = vxpose.xlu0.b32.cont [6/16] 0.0, 128
        %758 = vxpose.xlu0.b32.cont [7/16] 0.0, 128
        %759 = vxpose.xlu0.b32.cont [8/16] 0.0, 128
        %760 = vxpose.xlu0.b32.cont [9/16] 0.0, 128
        %761 = vxpose.xlu0.b32.cont [10/16] 0.0, 128
        %762 = vxpose.xlu0.b32.cont [11/16] 0.0, 128
        %763 = vxpose.xlu0.b32.cont [12/16] 0.0, 128
        %764 = vxpose.xlu0.b32.cont [13/16] 0.0, 128
        %765 = vxpose.xlu0.b32.cont [14/16] 0.0, 128
        %766 = vxpose.xlu0.b32.cont [15/16] 0.0, 128
        %767 = vxpose.xlu0.b32.end [16/16] 0.0, 128
        %v768 = vpop.trf.xlu0
        %v769 = vpop.trf.xlu0
        %v770 = vpop.trf.xlu0
        %v771 = vpop.trf.xlu0
        %v772 = vpop.trf.xlu0
        %v773 = vpop.trf.xlu0
        %v774 = vpop.trf.xlu0
        %v775 = vpop.trf.xlu0
        %v776 = vpop.trf.xlu0
        %v777 = vpop.trf.xlu0
        %v778 = vpop.trf.xlu0
        %v779 = vpop.trf.xlu0
        %v780 = vpop.trf.xlu0
        %v781 = vpop.trf.xlu0
        %v782 = vpop.trf.xlu0
        %v783 = vpop.trf.xlu0
        %784 = vxpose.xlu0.b32.start [1/16] %v518, 128
        %785 = vxpose.xlu0.b32.cont [2/16] 0.0, 128
        %786 = vxpose.xlu0.b32.cont [3/16] 0.0, 128
        %787 = vxpose.xlu0.b32.cont [4/16] 0.0, 128
        %788 = vxpose.xlu0.b32.cont [5/16] 0.0, 128
        %789 = vxpose.xlu0.b32.cont [6/16] 0.0, 128
        %790 = vxpose.xlu0.b32.cont [7/16] 0.0, 128
        %791 = vxpose.xlu0.b32.cont [8/16] 0.0, 128
        %792 = vxpose.xlu0.b32.cont [9/16] 0.0, 128
        %793 = vxpose.xlu0.b32.cont [10/16] 0.0, 128
        %794 = vxpose.xlu0.b32.cont [11/16] 0.0, 128
        %795 = vxpose.xlu0.b32.cont [12/16] 0.0, 128
        %796 = vxpose.xlu0.b32.cont [13/16] 0.0, 128
        %797 = vxpose.xlu0.b32.cont [14/16] 0.0, 128
        %798 = vxpose.xlu0.b32.cont [15/16] 0.0, 128
        %799 = vxpose.xlu0.b32.end [16/16] 0.0, 128
        %v800 = vpop.trf.xlu0
        %v801 = vpop.trf.xlu0
        %v802 = vpop.trf.xlu0
        %v803 = vpop.trf.xlu0
        %v804 = vpop.trf.xlu0
        %v805 = vpop.trf.xlu0
        %v806 = vpop.trf.xlu0
        %v807 = vpop.trf.xlu0
        %v808 = vpop.trf.xlu0
        %v809 = vpop.trf.xlu0
        %v810 = vpop.trf.xlu0
        %v811 = vpop.trf.xlu0
        %v812 = vpop.trf.xlu0
        %v813 = vpop.trf.xlu0
        %v814 = vpop.trf.xlu0
        %v815 = vpop.trf.xlu0
        %816 = vxpose.xlu0.b32.start [1/16] %v520, 128
        %817 = vxpose.xlu0.b32.cont [2/16] 0.0, 128
        %818 = vxpose.xlu0.b32.cont [3/16] 0.0, 128
        %819 = vxpose.xlu0.b32.cont [4/16] 0.0, 128
        %820 = vxpose.xlu0.b32.cont [5/16] 0.0, 128
        %821 = vxpose.xlu0.b32.cont [6/16] 0.0, 128
        %822 = vxpose.xlu0.b32.cont [7/16] 0.0, 128
        %823 = vxpose.xlu0.b32.cont [8/16] 0.0, 128
        %824 = vxpose.xlu0.b32.cont [9/16] 0.0, 128
        %825 = vxpose.xlu0.b32.cont [10/16] 0.0, 128
        %826 = vxpose.xlu0.b32.cont [11/16] 0.0, 128
        %827 = vxpose.xlu0.b32.cont [12/16] 0.0, 128
        %828 = vxpose.xlu0.b32.cont [13/16] 0.0, 128
        %829 = vxpose.xlu0.b32.cont [14/16] 0.0, 128
        %830 = vxpose.xlu0.b32.cont [15/16] 0.0, 128
        %831 = vxpose.xlu0.b32.end [16/16] 0.0, 128
        %v832 = vpop.trf.xlu0
        %v833 = vpop.trf.xlu0
        %v834 = vpop.trf.xlu0
        %v835 = vpop.trf.xlu0
        %v836 = vpop.trf.xlu0
        %v837 = vpop.trf.xlu0
        %v838 = vpop.trf.xlu0
        %v839 = vpop.trf.xlu0
        %v840 = vpop.trf.xlu0
        %v841 = vpop.trf.xlu0
        %v842 = vpop.trf.xlu0
        %v843 = vpop.trf.xlu0
        %v844 = vpop.trf.xlu0
        %v845 = vpop.trf.xlu0
        %v846 = vpop.trf.xlu0
        %v847 = vpop.trf.xlu0
        %848 = vxpose.xlu0.b32.start [1/16] %v523, 128
        %849 = vxpose.xlu0.b32.cont [2/16] 0.0, 128
        %850 = vxpose.xlu0.b32.cont [3/16] 0.0, 128
        %851 = vxpose.xlu0.b32.cont [4/16] 0.0, 128
        %852 = vxpose.xlu0.b32.cont [5/16] 0.0, 128
        %853 = vxpose.xlu0.b32.cont [6/16] 0.0, 128
        %854 = vxpose.xlu0.b32.cont [7/16] 0.0, 128
        %855 = vxpose.xlu0.b32.cont [8/16] 0.0, 128
        %856 = vxpose.xlu0.b32.cont [9/16] 0.0, 128
        %857 = vxpose.xlu0.b32.cont [10/16] 0.0, 128
        %858 = vxpose.xlu0.b32.cont [11/16] 0.0, 128
        %859 = vxpose.xlu0.b32.cont [12/16] 0.0, 128
        %860 = vxpose.xlu0.b32.cont [13/16] 0.0, 128
        %861 = vxpose.xlu0.b32.cont [14/16] 0.0, 128
        %862 = vxpose.xlu0.b32.cont [15/16] 0.0, 128
        %863 = vxpose.xlu0.b32.end [16/16] 0.0, 128
        %v864 = vpop.trf.xlu0
        %v865 = vpop.trf.xlu0
        %v866 = vpop.trf.xlu0
        %v867 = vpop.trf.xlu0
        %v868 = vpop.trf.xlu0
        %v869 = vpop.trf.xlu0
        %v870 = vpop.trf.xlu0
        %v871 = vpop.trf.xlu0
        %v872 = vpop.trf.xlu0
        %v873 = vpop.trf.xlu0
        %v874 = vpop.trf.xlu0
        %v875 = vpop.trf.xlu0
        %v876 = vpop.trf.xlu0
        %v877 = vpop.trf.xlu0
        %v878 = vpop.trf.xlu0
        %v879 = vpop.trf.xlu0
        %880 = vxpose.xlu0.b32.start [1/16] %v525, 128
        %881 = vxpose.xlu0.b32.cont [2/16] 0.0, 128
        %882 = vxpose.xlu0.b32.cont [3/16] 0.0, 128
        %883 = vxpose.xlu0.b32.cont [4/16] 0.0, 128
        %884 = vxpose.xlu0.b32.cont [5/16] 0.0, 128
        %885 = vxpose.xlu0.b32.cont [6/16] 0.0, 128
        %886 = vxpose.xlu0.b32.cont [7/16] 0.0, 128
        %887 = vxpose.xlu0.b32.cont [8/16] 0.0, 128
        %888 = vxpose.xlu0.b32.cont [9/16] 0.0, 128
        %889 = vxpose.xlu0.b32.cont [10/16] 0.0, 128
        %890 = vxpose.xlu0.b32.cont [11/16] 0.0, 128
        %891 = vxpose.xlu0.b32.cont [12/16] 0.0, 128
        %892 = vxpose.xlu0.b32.cont [13/16] 0.0, 128
        %893 = vxpose.xlu0.b32.cont [14/16] 0.0, 128
        %894 = vxpose.xlu0.b32.cont [15/16] 0.0, 128
        %895 = vxpose.xlu0.b32.end [16/16] 0.0, 128
        %v896 = vpop.trf.xlu0
        %v897 = vpop.trf.xlu0
        %v898 = vpop.trf.xlu0
        %v899 = vpop.trf.xlu0
        %v900 = vpop.trf.xlu0
        %v901 = vpop.trf.xlu0
        %v902 = vpop.trf.xlu0
        %v903 = vpop.trf.xlu0
        %v904 = vpop.trf.xlu0
        %v905 = vpop.trf.xlu0
        %v906 = vpop.trf.xlu0
        %v907 = vpop.trf.xlu0
        %v908 = vpop.trf.xlu0
        %v909 = vpop.trf.xlu0
        %v910 = vpop.trf.xlu0
        %v911 = vpop.trf.xlu0
        %912 = vxpose.xlu0.b32.start [1/16] %v528, 128
        %913 = vxpose.xlu0.b32.cont [2/16] 0.0, 128
        %914 = vxpose.xlu0.b32.cont [3/16] 0.0, 128
        %915 = vxpose.xlu0.b32.cont [4/16] 0.0, 128
        %916 = vxpose.xlu0.b32.cont [5/16] 0.0, 128
        %917 = vxpose.xlu0.b32.cont [6/16] 0.0, 128
        %918 = vxpose.xlu0.b32.cont [7/16] 0.0, 128
        %919 = vxpose.xlu0.b32.cont [8/16] 0.0, 128
        %920 = vxpose.xlu0.b32.cont [9/16] 0.0, 128
        %921 = vxpose.xlu0.b32.cont [10/16] 0.0, 128
        %922 = vxpose.xlu0.b32.cont [11/16] 0.0, 128
        %923 = vxpose.xlu0.b32.cont [12/16] 0.0, 128
        %924 = vxpose.xlu0.b32.cont [13/16] 0.0, 128
        %925 = vxpose.xlu0.b32.cont [14/16] 0.0, 128
        %926 = vxpose.xlu0.b32.cont [15/16] 0.0, 128
        %927 = vxpose.xlu0.b32.end [16/16] 0.0, 128
        %v928 = vpop.trf.xlu0
        %v929 = vpop.trf.xlu0
        %v930 = vpop.trf.xlu0
        %v931 = vpop.trf.xlu0
        %v932 = vpop.trf.xlu0
        %v933 = vpop.trf.xlu0
        %v934 = vpop.trf.xlu0
        %v935 = vpop.trf.xlu0
        %v936 = vpop.trf.xlu0
        %v937 = vpop.trf.xlu0
        %v938 = vpop.trf.xlu0
        %v939 = vpop.trf.xlu0
        %v940 = vpop.trf.xlu0
        %v941 = vpop.trf.xlu0
        %v942 = vpop.trf.xlu0
        %v943 = vpop.trf.xlu0
        %944 = vxpose.xlu0.b32.start [1/16] %v530, 128
        %945 = vxpose.xlu0.b32.cont [2/16] 0.0, 128
        %946 = vxpose.xlu0.b32.cont [3/16] 0.0, 128
        %947 = vxpose.xlu0.b32.cont [4/16] 0.0, 128
        %948 = vxpose.xlu0.b32.cont [5/16] 0.0, 128
        %949 = vxpose.xlu0.b32.cont [6/16] 0.0, 128
        %950 = vxpose.xlu0.b32.cont [7/16] 0.0, 128
        %951 = vxpose.xlu0.b32.cont [8/16] 0.0, 128
        %952 = vxpose.xlu0.b32.cont [9/16] 0.0, 128
        %953 = vxpose.xlu0.b32.cont [10/16] 0.0, 128
        %954 = vxpose.xlu0.b32.cont [11/16] 0.0, 128
        %955 = vxpose.xlu0.b32.cont [12/16] 0.0, 128
        %956 = vxpose.xlu0.b32.cont [13/16] 0.0, 128
        %957 = vxpose.xlu0.b32.cont [14/16] 0.0, 128
        %958 = vxpose.xlu0.b32.cont [15/16] 0.0, 128
        %959 = vxpose.xlu0.b32.end [16/16] 0.0, 128
        %v960 = vpop.trf.xlu0
        %v961 = vpop.trf.xlu0
        %v962 = vpop.trf.xlu0
        %v963 = vpop.trf.xlu0
        %v964 = vpop.trf.xlu0
        %v965 = vpop.trf.xlu0
        %v966 = vpop.trf.xlu0
        %v967 = vpop.trf.xlu0
        %v968 = vpop.trf.xlu0
        %v969 = vpop.trf.xlu0
        %v970 = vpop.trf.xlu0
        %v971 = vpop.trf.xlu0
        %v972 = vpop.trf.xlu0
        %v973 = vpop.trf.xlu0
        %v974 = vpop.trf.xlu0
        %v975 = vpop.trf.xlu0
        %v976 = vlaneseq
        %v977 = vshrl.u32 %v976, 7
        %v978 = vadd.s32 %v977, 8
        %v979 = vlaneseq
        %v980 = vand.u32 %v979, 127
        %vm981 = vcmp.ge.s32.totalorder %v977, %v980
        %vm982 = vcmp.ge.s32.totalorder %v978, %v980
        %v983 = vsel %vm981, 1.0, -10000.0
        %v984 = vsel %vm982, 1.0, -10000.0
        %vm985 = vcmask 64512
        %v987 = vsel %vm985, %v608, 0
        %v990 = vsel %vm985, %v609, 0
        %992 = vmatpush.msra.mxu0 0.0
        %993 = vmatpush.msra.mxu0 0.0
        %994 = vmatpush.msra.mxu0 0.0
        %995 = vmatpush.msra.mxu0 0.0
        %996 = vmatpush.msra.mxu0 0.0
        %997 = vmatpush.msra.mxu0 0.0
        %998 = vmatpush.msra.mxu0 0.0
        %999 = vmatpush.msra.mxu0 0.0
        %1000 = vmatpush.msra.mxu0 0.0
        %1001 = vmatpush.msra.mxu0 0.0
        %1002 = vmatpush.msra.mxu0 0.0
        %1003 = vmatpush.msra.mxu0 0.0
        %1004 = vmatpush.msra.mxu0 0.0
        %1005 = vmatpush.msra.mxu0 0.0
        %1006 = vmatpush.msra.mxu0 0.0
        %1007 = vmatpush.msra.mxu0 %v533
        %1008 = vmatmul.f32.gmra.mxu0 %v987
        %v1009 = vpop.f32.mrf.mxu0
        %v1010 = vadd.f32 %v983, %v1009
        %1011 = vmatmul.f32.gmra.mxu0 %v990
        %v1012 = vpop.f32.mrf.mxu0
        %v1013 = vadd.f32 %v984, %v1012
        %1014 = vdwg.mxu0
        %v1016 = vsel %vm985, %v640, 0
        %v1019 = vsel %vm985, %v641, 0
        %1021 = vmatpush.msra.mxu0 0.0
        %1022 = vmatpush.msra.mxu0 0.0
        %1023 = vmatpush.msra.mxu0 0.0
        %1024 = vmatpush.msra.mxu0 0.0
        %1025 = vmatpush.msra.mxu0 0.0
        %1026 = vmatpush.msra.mxu0 0.0
        %1027 = vmatpush.msra.mxu0 0.0
        %1028 = vmatpush.msra.mxu0 0.0
        %1029 = vmatpush.msra.mxu0 0.0
        %1030 = vmatpush.msra.mxu0 0.0
        %1031 = vmatpush.msra.mxu0 0.0
        %1032 = vmatpush.msra.mxu0 0.0
        %1033 = vmatpush.msra.mxu0 0.0
        %1034 = vmatpush.msra.mxu0 0.0
        %1035 = vmatpush.msra.mxu0 0.0
        %1036 = vmatpush.msra.mxu0 %v535
        %1037 = vmatmul.f32.gmra.mxu0 %v1016
        %v1038 = vpop.f32.mrf.mxu0
        %v1039 = vadd.f32 %v983, %v1038
        %1040 = vmatmul.f32.gmra.mxu0 %v1019
        %v1041 = vpop.f32.mrf.mxu0
        %v1042 = vadd.f32 %v984, %v1041
        %1043 = vdwg.mxu0
        %v1045 = vsel %vm985, %v672, 0
        %v1048 = vsel %vm985, %v673, 0
        %1050 = vmatpush.msra.mxu0 0.0
        %1051 = vmatpush.msra.mxu0 0.0
        %1052 = vmatpush.msra.mxu0 0.0
        %1053 = vmatpush.msra.mxu0 0.0
        %1054 = vmatpush.msra.mxu0 0.0
        %1055 = vmatpush.msra.mxu0 0.0
        %1056 = vmatpush.msra.mxu0 0.0
        %1057 = vmatpush.msra.mxu0 0.0
        %1058 = vmatpush.msra.mxu0 0.0
        %1059 = vmatpush.msra.mxu0 0.0
        %1060 = vmatpush.msra.mxu0 0.0
        %1061 = vmatpush.msra.mxu0 0.0
        %1062 = vmatpush.msra.mxu0 0.0
        %1063 = vmatpush.msra.mxu0 0.0
        %1064 = vmatpush.msra.mxu0 0.0
        %1065 = vmatpush.msra.mxu0 %v538
        %1066 = vmatmul.f32.gmra.mxu0 %v1045
        %v1067 = vpop.f32.mrf.mxu0
        %v1068 = vadd.f32 %v983, %v1067
        %1069 = vmatmul.f32.gmra.mxu0 %v1048
        %v1070 = vpop.f32.mrf.mxu0
        %v1071 = vadd.f32 %v984, %v1070
        %1072 = vdwg.mxu0
        %v1074 = vsel %vm985, %v704, 0
        %v1077 = vsel %vm985, %v705, 0
        %1079 = vmatpush.msra.mxu0 0.0
        %1080 = vmatpush.msra.mxu0 0.0
        %1081 = vmatpush.msra.mxu0 0.0
        %1082 = vmatpush.msra.mxu0 0.0
        %1083 = vmatpush.msra.mxu0 0.0
        %1084 = vmatpush.msra.mxu0 0.0
        %1085 = vmatpush.msra.mxu0 0.0
        %1086 = vmatpush.msra.mxu0 0.0
        %1087 = vmatpush.msra.mxu0 0.0
        %1088 = vmatpush.msra.mxu0 0.0
        %1089 = vmatpush.msra.mxu0 0.0
        %1090 = vmatpush.msra.mxu0 0.0
        %1091 = vmatpush.msra.mxu0 0.0
        %1092 = vmatpush.msra.mxu0 0.0
        %1093 = vmatpush.msra.mxu0 0.0
        %1094 = vmatpush.msra.mxu0 %v540
        %1095 = vmatmul.f32.gmra.mxu0 %v1074
        %v1096 = vpop.f32.mrf.mxu0
        %v1097 = vadd.f32 %v983, %v1096
        %1098 = vmatmul.f32.gmra.mxu0 %v1077
        %v1099 = vpop.f32.mrf.mxu0
        %v1100 = vadd.f32 %v984, %v1099
        %1101 = vdwg.mxu0
        %v1103 = vsel %vm985, %v736, 0
        %v1106 = vsel %vm985, %v737, 0
        %1108 = vmatpush.msra.mxu0 0.0
        %1109 = vmatpush.msra.mxu0 0.0
        %1110 = vmatpush.msra.mxu0 0.0
        %1111 = vmatpush.msra.mxu0 0.0
        %1112 = vmatpush.msra.mxu0 0.0
        %1113 = vmatpush.msra.mxu0 0.0
        %1114 = vmatpush.msra.mxu0 0.0
        %1115 = vmatpush.msra.mxu0 0.0
        %1116 = vmatpush.msra.mxu0 0.0
        %1117 = vmatpush.msra.mxu0 0.0
        %1118 = vmatpush.msra.mxu0 0.0
        %1119 = vmatpush.msra.mxu0 0.0
        %1120 = vmatpush.msra.mxu0 0.0
        %1121 = vmatpush.msra.mxu0 0.0
        %1122 = vmatpush.msra.mxu0 0.0
        %1123 = vmatpush.msra.mxu0 %v543
        %1124 = vmatmul.f32.gmra.mxu0 %v1103
        %v1125 = vpop.f32.mrf.mxu0
        %v1126 = vadd.f32 %v983, %v1125
        %1127 = vmatmul.f32.gmra.mxu0 %v1106
        %v1128 = vpop.f32.mrf.mxu0
        %v1129 = vadd.f32 %v984, %v1128
        %1130 = vdwg.mxu0
        %v1132 = vsel %vm985, %v768, 0
        %v1135 = vsel %vm985, %v769, 0
        %1137 = vmatpush.msra.mxu0 0.0
        %1138 = vmatpush.msra.mxu0 0.0
        %1139 = vmatpush.msra.mxu0 0.0
        %1140 = vmatpush.msra.mxu0 0.0
        %1141 = vmatpush.msra.mxu0 0.0
        %1142 = vmatpush.msra.mxu0 0.0
        %1143 = vmatpush.msra.mxu0 0.0
        %1144 = vmatpush.msra.mxu0 0.0
        %1145 = vmatpush.msra.mxu0 0.0
        %1146 = vmatpush.msra.mxu0 0.0
        %1147 = vmatpush.msra.mxu0 0.0
        %1148 = vmatpush.msra.mxu0 0.0
        %1149 = vmatpush.msra.mxu0 0.0
        %1150 = vmatpush.msra.mxu0 0.0
        %1151 = vmatpush.msra.mxu0 0.0
        %1152 = vmatpush.msra.mxu0 %v545
        %1153 = vmatmul.f32.gmra.mxu0 %v1132
        %v1154 = vpop.f32.mrf.mxu0
        %v1155 = vadd.f32 %v983, %v1154
        %1156 = vmatmul.f32.gmra.mxu0 %v1135
        %v1157 = vpop.f32.mrf.mxu0
        %v1158 = vadd.f32 %v984, %v1157
        %1159 = vdwg.mxu0
        %v1161 = vsel %vm985, %v800, 0
        %v1164 = vsel %vm985, %v801, 0
        %1166 = vmatpush.msra.mxu0 0.0
        %1167 = vmatpush.msra.mxu0 0.0
        %1168 = vmatpush.msra.mxu0 0.0
        %1169 = vmatpush.msra.mxu0 0.0
        %1170 = vmatpush.msra.mxu0 0.0
        %1171 = vmatpush.msra.mxu0 0.0
        %1172 = vmatpush.msra.mxu0 0.0
        %1173 = vmatpush.msra.mxu0 0.0
        %1174 = vmatpush.msra.mxu0 0.0
        %1175 = vmatpush.msra.mxu0 0.0
        %1176 = vmatpush.msra.mxu0 0.0
        %1177 = vmatpush.msra.mxu0 0.0
        %1178 = vmatpush.msra.mxu0 0.0
        %1179 = vmatpush.msra.mxu0 0.0
        %1180 = vmatpush.msra.mxu0 0.0
        %1181 = vmatpush.msra.mxu0 %v548
        %1182 = vmatmul.f32.gmra.mxu0 %v1161
        %v1183 = vpop.f32.mrf.mxu0
        %v1184 = vadd.f32 %v983, %v1183
        %1185 = vmatmul.f32.gmra.mxu0 %v1164
        %v1186 = vpop.f32.mrf.mxu0
        %v1187 = vadd.f32 %v984, %v1186
        %1188 = vdwg.mxu0
        %v1190 = vsel %vm985, %v832, 0
        %v1193 = vsel %vm985, %v833, 0
        %1195 = vmatpush.msra.mxu0 0.0
        %1196 = vmatpush.msra.mxu0 0.0
        %1197 = vmatpush.msra.mxu0 0.0
        %1198 = vmatpush.msra.mxu0 0.0
        %1199 = vmatpush.msra.mxu0 0.0
        %1200 = vmatpush.msra.mxu0 0.0
        %1201 = vmatpush.msra.mxu0 0.0
        %1202 = vmatpush.msra.mxu0 0.0
        %1203 = vmatpush.msra.mxu0 0.0
        %1204 = vmatpush.msra.mxu0 0.0
        %1205 = vmatpush.msra.mxu0 0.0
        %1206 = vmatpush.msra.mxu0 0.0
        %1207 = vmatpush.msra.mxu0 0.0
        %1208 = vmatpush.msra.mxu0 0.0
        %1209 = vmatpush.msra.mxu0 0.0
        %1210 = vmatpush.msra.mxu0 %v550
        %1211 = vmatmul.f32.gmra.mxu0 %v1190
        %v1212 = vpop.f32.mrf.mxu0
        %v1213 = vadd.f32 %v983, %v1212
        %1214 = vmatmul.f32.gmra.mxu0 %v1193
        %v1215 = vpop.f32.mrf.mxu0
        %v1216 = vadd.f32 %v984, %v1215
        %1217 = vdwg.mxu0
        %v1219 = vsel %vm985, %v864, 0
        %v1222 = vsel %vm985, %v865, 0
        %1224 = vmatpush.msra.mxu0 0.0
        %1225 = vmatpush.msra.mxu0 0.0
        %1226 = vmatpush.msra.mxu0 0.0
        %1227 = vmatpush.msra.mxu0 0.0
        %1228 = vmatpush.msra.mxu0 0.0
        %1229 = vmatpush.msra.mxu0 0.0
        %1230 = vmatpush.msra.mxu0 0.0
        %1231 = vmatpush.msra.mxu0 0.0
        %1232 = vmatpush.msra.mxu0 0.0
        %1233 = vmatpush.msra.mxu0 0.0
        %1234 = vmatpush.msra.mxu0 0.0
        %1235 = vmatpush.msra.mxu0 0.0
        %1236 = vmatpush.msra.mxu0 0.0
        %1237 = vmatpush.msra.mxu0 0.0
        %1238 = vmatpush.msra.mxu0 0.0
        %1239 = vmatpush.msra.mxu0 %v553
        %1240 = vmatmul.f32.gmra.mxu0 %v1219
        %v1241 = vpop.f32.mrf.mxu0
        %v1242 = vadd.f32 %v983, %v1241
        %1243 = vmatmul.f32.gmra.mxu0 %v1222
        %v1244 = vpop.f32.mrf.mxu0
        %v1245 = vadd.f32 %v984, %v1244
        %1246 = vdwg.mxu0
        %v1248 = vsel %vm985, %v896, 0
        %v1251 = vsel %vm985, %v897, 0
        %1253 = vmatpush.msra.mxu0 0.0
        %1254 = vmatpush.msra.mxu0 0.0
        %1255 = vmatpush.msra.mxu0 0.0
        %1256 = vmatpush.msra.mxu0 0.0
        %1257 = vmatpush.msra.mxu0 0.0
        %1258 = vmatpush.msra.mxu0 0.0
        %1259 = vmatpush.msra.mxu0 0.0
        %1260 = vmatpush.msra.mxu0 0.0
        %1261 = vmatpush.msra.mxu0 0.0
        %1262 = vmatpush.msra.mxu0 0.0
        %1263 = vmatpush.msra.mxu0 0.0
        %1264 = vmatpush.msra.mxu0 0.0
        %1265 = vmatpush.msra.mxu0 0.0
        %1266 = vmatpush.msra.mxu0 0.0
        %1267 = vmatpush.msra.mxu0 0.0
        %1268 = vmatpush.msra.mxu0 %v555
        %1269 = vmatmul.f32.gmra.mxu0 %v1248
        %v1270 = vpop.f32.mrf.mxu0
        %v1271 = vadd.f32 %v983, %v1270
        %1272 = vmatmul.f32.gmra.mxu0 %v1251
        %v1273 = vpop.f32.mrf.mxu0
        %v1274 = vadd.f32 %v984, %v1273
        %1275 = vdwg.mxu0
        %v1277 = vsel %vm985, %v928, 0
        %v1280 = vsel %vm985, %v929, 0
        %1282 = vmatpush.msra.mxu0 0.0
        %1283 = vmatpush.msra.mxu0 0.0
        %1284 = vmatpush.msra.mxu0 0.0
        %1285 = vmatpush.msra.mxu0 0.0
        %1286 = vmatpush.msra.mxu0 0.0
        %1287 = vmatpush.msra.mxu0 0.0
        %1288 = vmatpush.msra.mxu0 0.0
        %1289 = vmatpush.msra.mxu0 0.0
        %1290 = vmatpush.msra.mxu0 0.0
        %1291 = vmatpush.msra.mxu0 0.0
        %1292 = vmatpush.msra.mxu0 0.0
        %1293 = vmatpush.msra.mxu0 0.0
        %1294 = vmatpush.msra.mxu0 0.0
        %1295 = vmatpush.msra.mxu0 0.0
        %1296 = vmatpush.msra.mxu0 0.0
        %1297 = vmatpush.msra.mxu0 %v558
        %1298 = vmatmul.f32.gmra.mxu0 %v1277
        %v1299 = vpop.f32.mrf.mxu0
        %v1300 = vadd.f32 %v983, %v1299
        %1301 = vmatmul.f32.gmra.mxu0 %v1280
        %v1302 = vpop.f32.mrf.mxu0
        %v1303 = vadd.f32 %v984, %v1302
        %1304 = vdwg.mxu0
        %v1306 = vsel %vm985, %v960, 0
        %v1309 = vsel %vm985, %v961, 0
        %1311 = vmatpush.msra.mxu0 0.0
        %1312 = vmatpush.msra.mxu0 0.0
        %1313 = vmatpush.msra.mxu0 0.0
        %1314 = vmatpush.msra.mxu0 0.0
        %1315 = vmatpush.msra.mxu0 0.0
        %1316 = vmatpush.msra.mxu0 0.0
        %1317 = vmatpush.msra.mxu0 0.0
        %1318 = vmatpush.msra.mxu0 0.0
        %1319 = vmatpush.msra.mxu0 0.0
        %1320 = vmatpush.msra.mxu0 0.0
        %1321 = vmatpush.msra.mxu0 0.0
        %1322 = vmatpush.msra.mxu0 0.0
        %1323 = vmatpush.msra.mxu0 0.0
        %1324 = vmatpush.msra.mxu0 0.0
        %1325 = vmatpush.msra.mxu0 0.0
        %1326 = vmatpush.msra.mxu0 %v560
        %1327 = vmatmul.f32.gmra.mxu0 %v1306
        %v1328 = vpop.f32.mrf.mxu0
        %v1329 = vadd.f32 %v983, %v1328
        %1330 = vmatmul.f32.gmra.mxu0 %v1309
        %v1331 = vpop.f32.mrf.mxu0
        %v1332 = vadd.f32 %v984, %v1331
        %1333 = vdwg.mxu0
        %vm1334 = vcmask 130048
        %v1335 = vsel %vm1334, %v1010, -inf
        %1336 = vmax.xlane.f32.xlu0 %v1335
        %v1337 = vpop.xlane.xlu0 %1336
        %v1338 = vsel %vm1334, %v1013, -inf
        %1339 = vmax.xlane.f32.xlu0 %v1338
        %v1340 = vpop.xlane.xlu0 %1339
        %v1341 = vsel %vm1334, %v1039, -inf
        %1342 = vmax.xlane.f32.xlu0 %v1341
        %v1343 = vpop.xlane.xlu0 %1342
        %v1344 = vsel %vm1334, %v1042, -inf
        %1345 = vmax.xlane.f32.xlu0 %v1344
        %v1346 = vpop.xlane.xlu0 %1345
        %v1347 = vsel %vm1334, %v1068, -inf
        %1348 = vmax.xlane.f32.xlu0 %v1347
        %v1349 = vpop.xlane.xlu0 %1348
        %v1350 = vsel %vm1334, %v1071, -inf
        %1351 = vmax.xlane.f32.xlu0 %v1350
        %v1352 = vpop.xlane.xlu0 %1351
        %v1353 = vsel %vm1334, %v1097, -inf
        %1354 = vmax.xlane.f32.xlu0 %v1353
        %v1355 = vpop.xlane.xlu0 %1354
        %v1356 = vsel %vm1334, %v1100, -inf
        %1357 = vmax.xlane.f32.xlu0 %v1356
        %v1358 = vpop.xlane.xlu0 %1357
        %v1359 = vsel %vm1334, %v1126, -inf
        %1360 = vmax.xlane.f32.xlu0 %v1359
        %v1361 = vpop.xlane.xlu0 %1360
        %v1362 = vsel %vm1334, %v1129, -inf
        %1363 = vmax.xlane.f32.xlu0 %v1362
        %v1364 = vpop.xlane.xlu0 %1363
        %v1365 = vsel %vm1334, %v1155, -inf
        %1366 = vmax.xlane.f32.xlu0 %v1365
        %v1367 = vpop.xlane.xlu0 %1366
        %v1368 = vsel %vm1334, %v1158, -inf
        %1369 = vmax.xlane.f32.xlu0 %v1368
        %v1370 = vpop.xlane.xlu0 %1369
        %v1371 = vsel %vm1334, %v1184, -inf
        %1372 = vmax.xlane.f32.xlu0 %v1371
        %v1373 = vpop.xlane.xlu0 %1372
        %v1374 = vsel %vm1334, %v1187, -inf
        %1375 = vmax.xlane.f32.xlu0 %v1374
        %v1376 = vpop.xlane.xlu0 %1375
        %v1377 = vsel %vm1334, %v1213, -inf
        %1378 = vmax.xlane.f32.xlu0 %v1377
        %v1379 = vpop.xlane.xlu0 %1378
        %v1380 = vsel %vm1334, %v1216, -inf
        %1381 = vmax.xlane.f32.xlu0 %v1380
        %v1382 = vpop.xlane.xlu0 %1381
        %v1383 = vsel %vm1334, %v1242, -inf
        %1384 = vmax.xlane.f32.xlu0 %v1383
        %v1385 = vpop.xlane.xlu0 %1384
        %v1386 = vsel %vm1334, %v1245, -inf
        %1387 = vmax.xlane.f32.xlu0 %v1386
        %v1388 = vpop.xlane.xlu0 %1387
        %v1389 = vsel %vm1334, %v1271, -inf
        %1390 = vmax.xlane.f32.xlu0 %v1389
        %v1391 = vpop.xlane.xlu0 %1390
        %v1392 = vsel %vm1334, %v1274, -inf
        %1393 = vmax.xlane.f32.xlu0 %v1392
        %v1394 = vpop.xlane.xlu0 %1393
        %v1395 = vsel %vm1334, %v1300, -inf
        %1396 = vmax.xlane.f32.xlu0 %v1395
        %v1397 = vpop.xlane.xlu0 %1396
        %v1398 = vsel %vm1334, %v1303, -inf
        %1399 = vmax.xlane.f32.xlu0 %v1398
        %v1400 = vpop.xlane.xlu0 %1399
        %v1401 = vsel %vm1334, %v1329, -inf
        %1402 = vmax.xlane.f32.xlu0 %v1401
        %v1403 = vpop.xlane.xlu0 %1402
        %v1404 = vsel %vm1334, %v1332, -inf
        %1405 = vmax.xlane.f32.xlu0 %v1404
        %v1406 = vpop.xlane.xlu0 %1405
        %v1407 = vsub.f32 %v1010, %v1337
        %v1408 = vsub.f32 %v1013, %v1340
        %v1409 = vsub.f32 %v1039, %v1343
        %v1410 = vsub.f32 %v1042, %v1346
        %v1411 = vsub.f32 %v1068, %v1349
        %v1412 = vsub.f32 %v1071, %v1352
        %v1413 = vsub.f32 %v1097, %v1355
        %v1414 = vsub.f32 %v1100, %v1358
        %v1415 = vsub.f32 %v1126, %v1361
        %v1416 = vsub.f32 %v1129, %v1364
        %v1417 = vsub.f32 %v1155, %v1367
        %v1418 = vsub.f32 %v1158, %v1370
        %v1419 = vsub.f32 %v1184, %v1373
        %v1420 = vsub.f32 %v1187, %v1376
        %v1421 = vsub.f32 %v1213, %v1379
        %v1422 = vsub.f32 %v1216, %v1382
        %v1423 = vsub.f32 %v1242, %v1385
        %v1424 = vsub.f32 %v1245, %v1388
        %v1425 = vsub.f32 %v1271, %v1391
        %v1426 = vsub.f32 %v1274, %v1394
        %v1427 = vsub.f32 %v1300, %v1397
        %v1428 = vsub.f32 %v1303, %v1400
        %v1429 = vsub.f32 %v1329, %v1403
        %v1430 = vsub.f32 %v1332, %v1406
        %v1431 = vmul.f32 %v1407, 1.442695
        %v1432 = vpow.pop %v1431
        %v1433 = vmul.f32 %v1408, 1.442695
        %v1434 = vpow.pop %v1433
        %v1435 = vmul.f32 %v1409, 1.442695
        %v1436 = vpow.pop %v1435
        %v1437 = vmul.f32 %v1410, 1.442695
        %v1438 = vpow.pop %v1437
        %v1439 = vmul.f32 %v1411, 1.442695
        %v1440 = vpow.pop %v1439
        %v1441 = vmul.f32 %v1412, 1.442695
        %v1442 = vpow.pop %v1441
        %v1443 = vmul.f32 %v1413, 1.442695
        %v1444 = vpow.pop %v1443
        %v1445 = vmul.f32 %v1414, 1.442695
        %v1446 = vpow.pop %v1445
        %v1447 = vmul.f32 %v1415, 1.442695
        %v1448 = vpow.pop %v1447
        %v1449 = vmul.f32 %v1416, 1.442695
        %v1450 = vpow.pop %v1449
        %v1451 = vmul.f32 %v1417, 1.442695
        %v1452 = vpow.pop %v1451
        %v1453 = vmul.f32 %v1418, 1.442695
        %v1454 = vpow.pop %v1453
        %v1455 = vmul.f32 %v1419, 1.442695
        %v1456 = vpow.pop %v1455
        %v1457 = vmul.f32 %v1420, 1.442695
        %v1458 = vpow.pop %v1457
        %v1459 = vmul.f32 %v1421, 1.442695
        %v1460 = vpow.pop %v1459
        %v1461 = vmul.f32 %v1422, 1.442695
        %v1462 = vpow.pop %v1461
        %v1463 = vmul.f32 %v1423, 1.442695
        %v1464 = vpow.pop %v1463
        %v1465 = vmul.f32 %v1424, 1.442695
        %v1466 = vpow.pop %v1465
        %v1467 = vmul.f32 %v1425, 1.442695
        %v1468 = vpow.pop %v1467
        %v1469 = vmul.f32 %v1426, 1.442695
        %v1470 = vpow.pop %v1469
        %v1471 = vmul.f32 %v1427, 1.442695
        %v1472 = vpow.pop %v1471
        %v1473 = vmul.f32 %v1428, 1.442695
        %v1474 = vpow.pop %v1473
        %v1475 = vmul.f32 %v1429, 1.442695
        %v1476 = vpow.pop %v1475
        %v1477 = vmul.f32 %v1430, 1.442695
        %v1478 = vpow.pop %v1477
        %v1479 = vsel %vm1334, %v1432, 0.0
        %1480 = vadd.xlane.f32.xlu0 %v1479
        %v1481 = vpop.xlane.xlu0 %1480
        %v1482 = vsel %vm1334, %v1434, 0.0
        %1483 = vadd.xlane.f32.xlu0 %v1482
        %v1484 = vpop.xlane.xlu0 %1483
        %v1485 = vsel %vm1334, %v1436, 0.0
        %1486 = vadd.xlane.f32.xlu0 %v1485
        %v1487 = vpop.xlane.xlu0 %1486
        %v1488 = vsel %vm1334, %v1438, 0.0
        %1489 = vadd.xlane.f32.xlu0 %v1488
        %v1490 = vpop.xlane.xlu0 %1489
        %v1491 = vsel %vm1334, %v1440, 0.0
        %1492 = vadd.xlane.f32.xlu0 %v1491
        %v1493 = vpop.xlane.xlu0 %1492
        %v1494 = vsel %vm1334, %v1442, 0.0
        %1495 = vadd.xlane.f32.xlu0 %v1494
        %v1496 = vpop.xlane.xlu0 %1495
        %v1497 = vsel %vm1334, %v1444, 0.0
        %1498 = vadd.xlane.f32.xlu0 %v1497
        %v1499 = vpop.xlane.xlu0 %1498
        %v1500 = vsel %vm1334, %v1446, 0.0
        %1501 = vadd.xlane.f32.xlu0 %v1500
        %v1502 = vpop.xlane.xlu0 %1501
        %v1503 = vsel %vm1334, %v1448, 0.0
        %1504 = vadd.xlane.f32.xlu0 %v1503
        %v1505 = vpop.xlane.xlu0 %1504
        %v1506 = vsel %vm1334, %v1450, 0.0
        %1507 = vadd.xlane.f32.xlu0 %v1506
        %v1508 = vpop.xlane.xlu0 %1507
        %v1509 = vsel %vm1334, %v1452, 0.0
        %1510 = vadd.xlane.f32.xlu0 %v1509
        %v1511 = vpop.xlane.xlu0 %1510
        %v1512 = vsel %vm1334, %v1454, 0.0
        %1513 = vadd.xlane.f32.xlu0 %v1512
        %v1514 = vpop.xlane.xlu0 %1513
        %v1515 = vsel %vm1334, %v1456, 0.0
        %1516 = vadd.xlane.f32.xlu0 %v1515
        %v1517 = vpop.xlane.xlu0 %1516
        %v1518 = vsel %vm1334, %v1458, 0.0
        %1519 = vadd.xlane.f32.xlu0 %v1518
        %v1520 = vpop.xlane.xlu0 %1519
        %v1521 = vsel %vm1334, %v1460, 0.0
        %1522 = vadd.xlane.f32.xlu0 %v1521
        %v1523 = vpop.xlane.xlu0 %1522
        %v1524 = vsel %vm1334, %v1462, 0.0
        %1525 = vadd.xlane.f32.xlu0 %v1524
        %v1526 = vpop.xlane.xlu0 %1525
        %v1527 = vsel %vm1334, %v1464, 0.0
        %1528 = vadd.xlane.f32.xlu0 %v1527
        %v1529 = vpop.xlane.xlu0 %1528
        %v1530 = vsel %vm1334, %v1466, 0.0
        %1531 = vadd.xlane.f32.xlu0 %v1530
        %v1532 = vpop.xlane.xlu0 %1531
        %v1533 = vsel %vm1334, %v1468, 0.0
        %1534 = vadd.xlane.f32.xlu0 %v1533
        %v1535 = vpop.xlane.xlu0 %1534
        %v1536 = vsel %vm1334, %v1470, 0.0
        %1537 = vadd.xlane.f32.xlu0 %v1536
        %v1538 = vpop.xlane.xlu0 %1537
        %v1539 = vsel %vm1334, %v1472, 0.0
        %1540 = vadd.xlane.f32.xlu0 %v1539
        %v1541 = vpop.xlane.xlu0 %1540
        %v1542 = vsel %vm1334, %v1474, 0.0
        %1543 = vadd.xlane.f32.xlu0 %v1542
        %v1544 = vpop.xlane.xlu0 %1543
        %v1545 = vsel %vm1334, %v1476, 0.0
        %1546 = vadd.xlane.f32.xlu0 %v1545
        %v1547 = vpop.xlane.xlu0 %1546
        %v1548 = vsel %vm1334, %v1478, 0.0
        %1549 = vadd.xlane.f32.xlu0 %v1548
        %v1550 = vpop.xlane.xlu0 %1549
        %v1551 = vrcp.pop %v1481
        %v1552 = vrcp.pop %v1484
        %v1553 = vrcp.pop %v1487
        %v1554 = vrcp.pop %v1490
        %v1555 = vrcp.pop %v1493
        %v1556 = vrcp.pop %v1496
        %v1557 = vrcp.pop %v1499
        %v1558 = vrcp.pop %v1502
        %v1559 = vrcp.pop %v1505
        %v1560 = vrcp.pop %v1508
        %v1561 = vrcp.pop %v1511
        %v1562 = vrcp.pop %v1514
        %v1563 = vrcp.pop %v1517
        %v1564 = vrcp.pop %v1520
        %v1565 = vrcp.pop %v1523
        %v1566 = vrcp.pop %v1526
        %v1567 = vrcp.pop %v1529
        %v1568 = vrcp.pop %v1532
        %v1569 = vrcp.pop %v1535
        %v1570 = vrcp.pop %v1538
        %v1571 = vrcp.pop %v1541
        %v1572 = vrcp.pop %v1544
        %v1573 = vrcp.pop %v1547
        %v1574 = vrcp.pop %v1550
        %v1575 = vmul.f32 %v1432, %v1551
        %v1576 = vmul.f32 %v1434, %v1552
        %v1577 = vmul.f32 %v1436, %v1553
        %v1578 = vmul.f32 %v1438, %v1554
        %v1579 = vmul.f32 %v1440, %v1555
        %v1580 = vmul.f32 %v1442, %v1556
        %v1581 = vmul.f32 %v1444, %v1557
        %v1582 = vmul.f32 %v1446, %v1558
        %v1583 = vmul.f32 %v1448, %v1559
        %v1584 = vmul.f32 %v1450, %v1560
        %v1585 = vmul.f32 %v1452, %v1561
        %v1586 = vmul.f32 %v1454, %v1562
        %v1587 = vmul.f32 %v1456, %v1563
        %v1588 = vmul.f32 %v1458, %v1564
        %v1589 = vmul.f32 %v1460, %v1565
        %v1590 = vmul.f32 %v1462, %v1566
        %v1591 = vmul.f32 %v1464, %v1567
        %v1592 = vmul.f32 %v1466, %v1568
        %v1593 = vmul.f32 %v1468, %v1569
        %v1594 = vmul.f32 %v1470, %v1570
        %v1595 = vmul.f32 %v1472, %v1571
        %v1596 = vmul.f32 %v1474, %v1572
        %v1597 = vmul.f32 %v1476, %v1573
        %v1598 = vmul.f32 %v1478, %v1574
        %v1600 = vsel %vm1334, %v563, 0
        %v1603 = vsel %vm1334, %v1575, 0
        %v1606 = vsel %vm1334, %v1576, 0
        %1608 = vmatpush.xpose.msra.mxu0 0.0
        %1609 = vmatpush.xpose.msra.mxu0 0.0
        %1610 = vmatpush.xpose.msra.mxu0 0.0
        %1611 = vmatpush.xpose.msra.mxu0 0.0
        %1612 = vmatpush.xpose.msra.mxu0 0.0
        %1613 = vmatpush.xpose.msra.mxu0 0.0
        %1614 = vmatpush.xpose.msra.mxu0 0.0
        %1615 = vmatpush.xpose.msra.mxu0 0.0
        %1616 = vmatpush.xpose.msra.mxu0 0.0
        %1617 = vmatpush.xpose.msra.mxu0 0.0
        %1618 = vmatpush.xpose.msra.mxu0 0.0
        %1619 = vmatpush.xpose.msra.mxu0 0.0
        %1620 = vmatpush.xpose.msra.mxu0 0.0
        %1621 = vmatpush.xpose.msra.mxu0 0.0
        %1622 = vmatpush.xpose.msra.mxu0 %v1606
        %1623 = vmatpush.xpose.msra.mxu0 %v1603
        %1624 = vmatmul.f32.gmra.mxu0 %v1600
        %v1625 = vpop.f32.mrf.mxu0
        %v1626 = vadd.f32 0.0, %v1625
        %1627 = vdwg.mxu0
        %v1629 = vsel %vm1334, %v565, 0
        %v1632 = vsel %vm1334, %v1577, 0
        %v1635 = vsel %vm1334, %v1578, 0
        %1637 = vmatpush.xpose.msra.mxu0 0.0
        %1638 = vmatpush.xpose.msra.mxu0 0.0
        %1639 = vmatpush.xpose.msra.mxu0 0.0
        %1640 = vmatpush.xpose.msra.mxu0 0.0
        %1641 = vmatpush.xpose.msra.mxu0 0.0
        %1642 = vmatpush.xpose.msra.mxu0 0.0
        %1643 = vmatpush.xpose.msra.mxu0 0.0
        %1644 = vmatpush.xpose.msra.mxu0 0.0
        %1645 = vmatpush.xpose.msra.mxu0 0.0
        %1646 = vmatpush.xpose.msra.mxu0 0.0
        %1647 = vmatpush.xpose.msra.mxu0 0.0
        %1648 = vmatpush.xpose.msra.mxu0 0.0
        %1649 = vmatpush.xpose.msra.mxu0 0.0
        %1650 = vmatpush.xpose.msra.mxu0 0.0
        %1651 = vmatpush.xpose.msra.mxu0 %v1635
        %1652 = vmatpush.xpose.msra.mxu0 %v1632
        %1653 = vmatmul.f32.gmra.mxu0 %v1629
        %v1654 = vpop.f32.mrf.mxu0
        %v1655 = vadd.f32 0.0, %v1654
        %1656 = vdwg.mxu0
        %v1658 = vsel %vm1334, %v568, 0
        %v1661 = vsel %vm1334, %v1579, 0
        %v1664 = vsel %vm1334, %v1580, 0
        %1666 = vmatpush.xpose.msra.mxu0 0.0
        %1667 = vmatpush.xpose.msra.mxu0 0.0
        %1668 = vmatpush.xpose.msra.mxu0 0.0
        %1669 = vmatpush.xpose.msra.mxu0 0.0
        %1670 = vmatpush.xpose.msra.mxu0 0.0
        %1671 = vmatpush.xpose.msra.mxu0 0.0
        %1672 = vmatpush.xpose.msra.mxu0 0.0
        %1673 = vmatpush.xpose.msra.mxu0 0.0
        %1674 = vmatpush.xpose.msra.mxu0 0.0
        %1675 = vmatpush.xpose.msra.mxu0 0.0
        %1676 = vmatpush.xpose.msra.mxu0 0.0
        %1677 = vmatpush.xpose.msra.mxu0 0.0
        %1678 = vmatpush.xpose.msra.mxu0 0.0
        %1679 = vmatpush.xpose.msra.mxu0 0.0
        %1680 = vmatpush.xpose.msra.mxu0 %v1664
        %1681 = vmatpush.xpose.msra.mxu0 %v1661
        %1682 = vmatmul.f32.gmra.mxu0 %v1658
        %v1683 = vpop.f32.mrf.mxu0
        %v1684 = vadd.f32 0.0, %v1683
        %1685 = vdwg.mxu0
        %v1687 = vsel %vm1334, %v570, 0
        %v1690 = vsel %vm1334, %v1581, 0
        %v1693 = vsel %vm1334, %v1582, 0
        %1695 = vmatpush.xpose.msra.mxu0 0.0
        %1696 = vmatpush.xpose.msra.mxu0 0.0
        %1697 = vmatpush.xpose.msra.mxu0 0.0
        %1698 = vmatpush.xpose.msra.mxu0 0.0
        %1699 = vmatpush.xpose.msra.mxu0 0.0
        %1700 = vmatpush.xpose.msra.mxu0 0.0
        %1701 = vmatpush.xpose.msra.mxu0 0.0
        %1702 = vmatpush.xpose.msra.mxu0 0.0
        %1703 = vmatpush.xpose.msra.mxu0 0.0
        %1704 = vmatpush.xpose.msra.mxu0 0.0
        %1705 = vmatpush.xpose.msra.mxu0 0.0
        %1706 = vmatpush.xpose.msra.mxu0 0.0
        %1707 = vmatpush.xpose.msra.mxu0 0.0
        %1708 = vmatpush.xpose.msra.mxu0 0.0
        %1709 = vmatpush.xpose.msra.mxu0 %v1693
        %1710 = vmatpush.xpose.msra.mxu0 %v1690
        %1711 = vmatmul.f32.gmra.mxu0 %v1687
        %v1712 = vpop.f32.mrf.mxu0
        %v1713 = vadd.f32 0.0, %v1712
        %1714 = vdwg.mxu0
        %v1716 = vsel %vm1334, %v573, 0
        %v1719 = vsel %vm1334, %v1583, 0
        %v1722 = vsel %vm1334, %v1584, 0
        %1724 = vmatpush.xpose.msra.mxu0 0.0
        %1725 = vmatpush.xpose.msra.mxu0 0.0
        %1726 = vmatpush.xpose.msra.mxu0 0.0
        %1727 = vmatpush.xpose.msra.mxu0 0.0
        %1728 = vmatpush.xpose.msra.mxu0 0.0
        %1729 = vmatpush.xpose.msra.mxu0 0.0
        %1730 = vmatpush.xpose.msra.mxu0 0.0
        %1731 = vmatpush.xpose.msra.mxu0 0.0
        %1732 = vmatpush.xpose.msra.mxu0 0.0
        %1733 = vmatpush.xpose.msra.mxu0 0.0
        %1734 = vmatpush.xpose.msra.mxu0 0.0
        %1735 = vmatpush.xpose.msra.mxu0 0.0
        %1736 = vmatpush.xpose.msra.mxu0 0.0
        %1737 = vmatpush.xpose.msra.mxu0 0.0
        %1738 = vmatpush.xpose.msra.mxu0 %v1722
        %1739 = vmatpush.xpose.msra.mxu0 %v1719
        %1740 = vmatmul.f32.gmra.mxu0 %v1716
        %v1741 = vpop.f32.mrf.mxu0
        %v1742 = vadd.f32 0.0, %v1741
        %1743 = vdwg.mxu0
        %v1745 = vsel %vm1334, %v575, 0
        %v1748 = vsel %vm1334, %v1585, 0
        %v1751 = vsel %vm1334, %v1586, 0
        %1753 = vmatpush.xpose.msra.mxu0 0.0
        %1754 = vmatpush.xpose.msra.mxu0 0.0
        %1755 = vmatpush.xpose.msra.mxu0 0.0
        %1756 = vmatpush.xpose.msra.mxu0 0.0
        %1757 = vmatpush.xpose.msra.mxu0 0.0
        %1758 = vmatpush.xpose.msra.mxu0 0.0
        %1759 = vmatpush.xpose.msra.mxu0 0.0
        %1760 = vmatpush.xpose.msra.mxu0 0.0
        %1761 = vmatpush.xpose.msra.mxu0 0.0
        %1762 = vmatpush.xpose.msra.mxu0 0.0
        %1763 = vmatpush.xpose.msra.mxu0 0.0
        %1764 = vmatpush.xpose.msra.mxu0 0.0
        %1765 = vmatpush.xpose.msra.mxu0 0.0
        %1766 = vmatpush.xpose.msra.mxu0 0.0
        %1767 = vmatpush.xpose.msra.mxu0 %v1751
        %1768 = vmatpush.xpose.msra.mxu0 %v1748
        %1769 = vmatmul.f32.gmra.mxu0 %v1745
        %v1770 = vpop.f32.mrf.mxu0
        %v1771 = vadd.f32 0.0, %v1770
        %1772 = vdwg.mxu0
        %v1774 = vsel %vm1334, %v578, 0
        %v1777 = vsel %vm1334, %v1587, 0
        %v1780 = vsel %vm1334, %v1588, 0
        %1782 = vmatpush.xpose.msra.mxu0 0.0
        %1783 = vmatpush.xpose.msra.mxu0 0.0
        %1784 = vmatpush.xpose.msra.mxu0 0.0
        %1785 = vmatpush.xpose.msra.mxu0 0.0
        %1786 = vmatpush.xpose.msra.mxu0 0.0
        %1787 = vmatpush.xpose.msra.mxu0 0.0
        %1788 = vmatpush.xpose.msra.mxu0 0.0
        %1789 = vmatpush.xpose.msra.mxu0 0.0
        %1790 = vmatpush.xpose.msra.mxu0 0.0
        %1791 = vmatpush.xpose.msra.mxu0 0.0
        %1792 = vmatpush.xpose.msra.mxu0 0.0
        %1793 = vmatpush.xpose.msra.mxu0 0.0
        %1794 = vmatpush.xpose.msra.mxu0 0.0
        %1795 = vmatpush.xpose.msra.mxu0 0.0
        %1796 = vmatpush.xpose.msra.mxu0 %v1780
        %1797 = vmatpush.xpose.msra.mxu0 %v1777
        %1798 = vmatmul.f32.gmra.mxu0 %v1774
        %v1799 = vpop.f32.mrf.mxu0
        %v1800 = vadd.f32 0.0, %v1799
        %1801 = vdwg.mxu0
        %v1803 = vsel %vm1334, %v580, 0
        %v1806 = vsel %vm1334, %v1589, 0
        %v1809 = vsel %vm1334, %v1590, 0
        %1811 = vmatpush.xpose.msra.mxu0 0.0
        %1812 = vmatpush.xpose.msra.mxu0 0.0
        %1813 = vmatpush.xpose.msra.mxu0 0.0
        %1814 = vmatpush.xpose.msra.mxu0 0.0
        %1815 = vmatpush.xpose.msra.mxu0 0.0
        %1816 = vmatpush.xpose.msra.mxu0 0.0
        %1817 = vmatpush.xpose.msra.mxu0 0.0
        %1818 = vmatpush.xpose.msra.mxu0 0.0
        %1819 = vmatpush.xpose.msra.mxu0 0.0
        %1820 = vmatpush.xpose.msra.mxu0 0.0
        %1821 = vmatpush.xpose.msra.mxu0 0.0
        %1822 = vmatpush.xpose.msra.mxu0 0.0
        %1823 = vmatpush.xpose.msra.mxu0 0.0
        %1824 = vmatpush.xpose.msra.mxu0 0.0
        %1825 = vmatpush.xpose.msra.mxu0 %v1809
        %1826 = vmatpush.xpose.msra.mxu0 %v1806
        %1827 = vmatmul.f32.gmra.mxu0 %v1803
        %v1828 = vpop.f32.mrf.mxu0
        %v1829 = vadd.f32 0.0, %v1828
        %1830 = vdwg.mxu0
        %v1832 = vsel %vm1334, %v583, 0
        %v1835 = vsel %vm1334, %v1591, 0
        %v1838 = vsel %vm1334, %v1592, 0
        %1840 = vmatpush.xpose.msra.mxu0 0.0
        %1841 = vmatpush.xpose.msra.mxu0 0.0
        %1842 = vmatpush.xpose.msra.mxu0 0.0
        %1843 = vmatpush.xpose.msra.mxu0 0.0
        %1844 = vmatpush.xpose.msra.mxu0 0.0
        %1845 = vmatpush.xpose.msra.mxu0 0.0
        %1846 = vmatpush.xpose.msra.mxu0 0.0
        %1847 = vmatpush.xpose.msra.mxu0 0.0
        %1848 = vmatpush.xpose.msra.mxu0 0.0
        %1849 = vmatpush.xpose.msra.mxu0 0.0
        %1850 = vmatpush.xpose.msra.mxu0 0.0
        %1851 = vmatpush.xpose.msra.mxu0 0.0
        %1852 = vmatpush.xpose.msra.mxu0 0.0
        %1853 = vmatpush.xpose.msra.mxu0 0.0
        %1854 = vmatpush.xpose.msra.mxu0 %v1838
        %1855 = vmatpush.xpose.msra.mxu0 %v1835
        %1856 = vmatmul.f32.gmra.mxu0 %v1832
        %v1857 = vpop.f32.mrf.mxu0
        %v1858 = vadd.f32 0.0, %v1857
        %1859 = vdwg.mxu0
        %v1861 = vsel %vm1334, %v585, 0
        %v1864 = vsel %vm1334, %v1593, 0
        %v1867 = vsel %vm1334, %v1594, 0
        %1869 = vmatpush.xpose.msra.mxu0 0.0
        %1870 = vmatpush.xpose.msra.mxu0 0.0
        %1871 = vmatpush.xpose.msra.mxu0 0.0
        %1872 = vmatpush.xpose.msra.mxu0 0.0
        %1873 = vmatpush.xpose.msra.mxu0 0.0
        %1874 = vmatpush.xpose.msra.mxu0 0.0
        %1875 = vmatpush.xpose.msra.mxu0 0.0
        %1876 = vmatpush.xpose.msra.mxu0 0.0
        %1877 = vmatpush.xpose.msra.mxu0 0.0
        %1878 = vmatpush.xpose.msra.mxu0 0.0
        %1879 = vmatpush.xpose.msra.mxu0 0.0
        %1880 = vmatpush.xpose.msra.mxu0 0.0
        %1881 = vmatpush.xpose.msra.mxu0 0.0
        %1882 = vmatpush.xpose.msra.mxu0 0.0
        %1883 = vmatpush.xpose.msra.mxu0 %v1867
        %1884 = vmatpush.xpose.msra.mxu0 %v1864
        %1885 = vmatmul.f32.gmra.mxu0 %v1861
        %v1886 = vpop.f32.mrf.mxu0
        %v1887 = vadd.f32 0.0, %v1886
        %1888 = vdwg.mxu0
        %v1890 = vsel %vm1334, %v588, 0
        %v1893 = vsel %vm1334, %v1595, 0
        %v1896 = vsel %vm1334, %v1596, 0
        %1898 = vmatpush.xpose.msra.mxu0 0.0
        %1899 = vmatpush.xpose.msra.mxu0 0.0
        %1900 = vmatpush.xpose.msra.mxu0 0.0
        %1901 = vmatpush.xpose.msra.mxu0 0.0
        %1902 = vmatpush.xpose.msra.mxu0 0.0
        %1903 = vmatpush.xpose.msra.mxu0 0.0
        %1904 = vmatpush.xpose.msra.mxu0 0.0
        %1905 = vmatpush.xpose.msra.mxu0 0.0
        %1906 = vmatpush.xpose.msra.mxu0 0.0
        %1907 = vmatpush.xpose.msra.mxu0 0.0
        %1908 = vmatpush.xpose.msra.mxu0 0.0
        %1909 = vmatpush.xpose.msra.mxu0 0.0
        %1910 = vmatpush.xpose.msra.mxu0 0.0
        %1911 = vmatpush.xpose.msra.mxu0 0.0
        %1912 = vmatpush.xpose.msra.mxu0 %v1896
        %1913 = vmatpush.xpose.msra.mxu0 %v1893
        %1914 = vmatmul.f32.gmra.mxu0 %v1890
        %v1915 = vpop.f32.mrf.mxu0
        %v1916 = vadd.f32 0.0, %v1915
        %1917 = vdwg.mxu0
        %v1919 = vsel %vm1334, %v590, 0
        %v1922 = vsel %vm1334, %v1597, 0
        %v1925 = vsel %vm1334, %v1598, 0
        %1927 = vmatpush.xpose.msra.mxu0 0.0
        %1928 = vmatpush.xpose.msra.mxu0 0.0
        %1929 = vmatpush.xpose.msra.mxu0 0.0
        %1930 = vmatpush.xpose.msra.mxu0 0.0
        %1931 = vmatpush.xpose.msra.mxu0 0.0
        %1932 = vmatpush.xpose.msra.mxu0 0.0
        %1933 = vmatpush.xpose.msra.mxu0 0.0
        %1934 = vmatpush.xpose.msra.mxu0 0.0
        %1935 = vmatpush.xpose.msra.mxu0 0.0
        %1936 = vmatpush.xpose.msra.mxu0 0.0
        %1937 = vmatpush.xpose.msra.mxu0 0.0
        %1938 = vmatpush.xpose.msra.mxu0 0.0
        %1939 = vmatpush.xpose.msra.mxu0 0.0
        %1940 = vmatpush.xpose.msra.mxu0 0.0
        %1941 = vmatpush.xpose.msra.mxu0 %v1925
        %1942 = vmatpush.xpose.msra.mxu0 %v1922
        %1943 = vmatmul.f32.gmra.mxu0 %v1919
        %v1944 = vpop.f32.mrf.mxu0
        %v1945 = vadd.f32 0.0, %v1944
        %1946 = vdwg.mxu0
        %1947 = vxpose.xlu0.b32.start [1/16] %v1626, 128
        %1948 = vxpose.xlu0.b32.cont [2/16] %v1655, 128
        %1949 = vxpose.xlu0.b32.cont [3/16] %v1684, 128
        %1950 = vxpose.xlu0.b32.cont [4/16] %v1713, 128
        %1951 = vxpose.xlu0.b32.cont [5/16] %v1742, 128
        %1952 = vxpose.xlu0.b32.cont [6/16] %v1771, 128
        %1953 = vxpose.xlu0.b32.cont [7/16] %v1800, 128
        %1954 = vxpose.xlu0.b32.cont [8/16] %v1829, 128
        %1955 = vxpose.xlu0.b32.cont [9/16] %v1858, 128
        %1956 = vxpose.xlu0.b32.cont [10/16] %v1887, 128
        %1957 = vxpose.xlu0.b32.cont [11/16] %v1916, 128
        %1958 = vxpose.xlu0.b32.cont [12/16] %v1945, 128
        %1959 = vxpose.xlu0.b32.cont [13/16] 0.0, 128
        %1960 = vxpose.xlu0.b32.cont [14/16] 0.0, 128
        %1961 = vxpose.xlu0.b32.cont [15/16] 0.0, 128
        %1962 = vxpose.xlu0.b32.end [16/16] 0.0, 128
        %v1963 = vpop.trf.xlu0
        %v1964 = vpop.trf.xlu0
        %v1965 = vpop.trf.xlu0
        %v1966 = vpop.trf.xlu0
        %v1967 = vpop.trf.xlu0
        %v1968 = vpop.trf.xlu0
        %v1969 = vpop.trf.xlu0
        %v1970 = vpop.trf.xlu0
        %v1971 = vpop.trf.xlu0
        %v1972 = vpop.trf.xlu0
        %v1973 = vpop.trf.xlu0
        %v1974 = vpop.trf.xlu0
        %v1975 = vpop.trf.xlu0
        %v1976 = vpop.trf.xlu0
        %v1977 = vpop.trf.xlu0
        %v1978 = vpop.trf.xlu0
        %v1979 = vpack.c.bf16 %v1964, %v1963
        %v1980 = vld [vmem:[#allocation7] sm:$0xf]
        %v1981 = vld [vmem:[#allocation7 + $0x4] sm:$0xf]
        %v1982 = vld [vmem:[#allocation7 + $0x8] sm:$0xf]
        %v1983 = vld [vmem:[#allocation7 + $0xc] sm:$0xf]
        %v1984 = vld [vmem:[#allocation7 + $0x10] sm:$0xf]
        %v1985 = vld [vmem:[#allocation7 + $0x14] sm:$0xf]
        %v1986 = vld [vmem:[#allocation7 + $0x18] sm:$0xf]
        %v1987 = vld [vmem:[#allocation7 + $0x1c] sm:$0xf]
        %v1988 = vld [vmem:[#allocation7 + $0x20] sm:$0xf]
        %v1989 = vld [vmem:[#allocation7 + $0x24] sm:$0xf]
        %v1990 = vld [vmem:[#allocation7 + $0x28] sm:$0xf]
        %v1991 = vld [vmem:[#allocation7 + $0x2c] sm:$0xf]
        %v1992 = vld [vmem:[%s3] sm:$0x1]
        %v1994 = vperm.slane %v1992, 0
        %v2008 = vunpack.c.l.b16 %v1980
        %v2009 = vunpack.c.l.b16 %v1981
        %v2010 = vunpack.c.l.b16 %v1982
        %v2011 = vunpack.c.l.b16 %v1983
        %v2012 = vunpack.c.l.b16 %v1984
        %v2013 = vunpack.c.l.b16 %v1985
        %v2014 = vunpack.c.l.b16 %v1986
        %v2015 = vunpack.c.l.b16 %v1987
        %v2016 = vunpack.c.l.b16 %v1988
        %v2017 = vunpack.c.l.b16 %v1989
        %v2018 = vunpack.c.l.b16 %v1990
        %v2019 = vunpack.c.l.b16 %v1991
        %v2020 = vpack.c.b16 %v2009, %v2008
        %v2021 = vpack.c.b16 %v2011, %v2010
        %v2022 = vpack.c.b16 %v2013, %v2012
        %v2023 = vpack.c.b16 %v2015, %v2014
        %v2024 = vpack.c.b16 %v2017, %v2016
        %v2025 = vpack.c.b16 %v2019, %v2018
        %v2033 = vsel %vm435, %v1979, 0
        %2035 = vmatpush.bf16.msra.mxu0 0
        %2036 = vmatpush.bf16.msra.mxu0 0
        %2037 = vmatpush.bf16.msra.mxu0 %v2025
        %2038 = vmatpush.bf16.msra.mxu0 %v2024
        %2039 = vmatpush.bf16.msra.mxu0 %v2023
        %2040 = vmatpush.bf16.msra.mxu0 %v2022
        %2041 = vmatpush.bf16.msra.mxu0 %v2021
        %2042 = vmatpush.bf16.msra.mxu0 %v2020
        %2043 = vmatmul.bf16.gmra.mxu0 %v2033
        %v2044 = vpop.f32.mrf.mxu0
        %v2045 = vadd.f32 %v1994, %v2044
        %v2046 = vpop.f32.mrf.mxu0
        %v2047 = vadd.f32 %v1994, %v2046
        %2048 = vdwg.mxu0
        %v2049 = vadd.f32 %v2045, %v306
        %v2050 = vadd.f32 %v2047, %v307
        %v2051 = vsel %vm435, %v2049, 0.0
        %2052 = vadd.xlane.f32.xlu0 %v2051
        %v2053 = vpop.xlane.xlu0 %2052
        %v2054 = vsel %vm435, %v2050, 0.0
        %2055 = vadd.xlane.f32.xlu0 %v2054
        %v2056 = vpop.xlane.xlu0 %2055
        %v2057 = vrcp.pop 96.0
        %v2058 = vmul.f32 96.0, %v2057
        %v2059 = vsub.f32 1.0, %v2058
        %v2060 = vmul.f32 %v2057, %v2059
        %v2061 = vadd.f32 %v2057, %v2060
        %vm2062 = vweird.f32 %v2057
        %v2063 = vsel %vm2062, %v2057, %v2061
        %v2064 = vmul.f32 %v2053, %v2063
        %v2065 = vmul.f32 %v2056, %v2063
        %v2066 = vmul.f32 %v2049, %v2049
        %v2067 = vmul.f32 %v2050, %v2050
        %v2068 = vsel %vm435, %v2066, 0.0
        %2069 = vadd.xlane.f32.xlu0 %v2068
        %v2070 = vpop.xlane.xlu0 %2069
        %v2071 = vsel %vm435, %v2067, 0.0
        %2072 = vadd.xlane.f32.xlu0 %v2071
        %v2073 = vpop.xlane.xlu0 %2072
        %v2074 = vmul.f32 %v2070, %v2063
        %v2075 = vmul.f32 %v2073, %v2063
        %v2076 = vmul.f32 %v2064, %v2064
        %v2077 = vmul.f32 %v2065, %v2065
        %v2078 = vsub.f32 %v2074, %v2076
        %v2079 = vsub.f32 %v2075, %v2077
        %v2080 = vsub.f32 %v2049, %v2064
        %v2081 = vsub.f32 %v2050, %v2065
        %v2082 = vadd.f32 %v2078, 1e-05
        %v2083 = vadd.f32 %v2079, 1e-05
        %v2084 = vrsqrt.pop %v2082
        %v2085 = vmul.f32 %v2084, %v2082
        %v2086 = vmul.f32 %v2085, %v2084
        %v2087 = vmul.f32 0.5, %v2086
        %v2088 = vsub.f32 1.5, %v2087
        %v2089 = vmul.f32 %v2084, %v2088
        %vm2090 = vweird.f32 %v2082
        %vm2091 = vweird.f32 %v2084
        %vm2092 = vmor %vm2090, %vm2091
        %v2093 = vsel %vm2092, %v2084, %v2089
        %v2094 = vrsqrt.pop %v2083
        %v2095 = vmul.f32 %v2094, %v2083
        %v2096 = vmul.f32 %v2095, %v2094
        %v2097 = vmul.f32 0.5, %v2096
        %v2098 = vsub.f32 1.5, %v2097
        %v2099 = vmul.f32 %v2094, %v2098
        %vm2100 = vweird.f32 %v2083
        %vm2101 = vweird.f32 %v2094
        %vm2102 = vmor %vm2100, %vm2101
        %v2103 = vsel %vm2102, %v2094, %v2099
        %v2104 = vmul.f32 %v2080, %v2093
        %v2105 = vmul.f32 %v2081, %v2103
        %v2106 = vld [vmem:[%s4] sm:$0x1]
        %v2108 = vperm.slane %v2106, 0
        %v2110 = vmul.f32 %v2104, %v2108
        %v2111 = vmul.f32 %v2105, %v2108
        %v2112 = vld [vmem:[%s5] sm:$0x1]
        %v2114 = vperm.slane %v2112, 0
        %v2116 = vadd.f32 %v2110, %v2114
        %v2117 = vadd.f32 %v2111, %v2114
        %2118 = vst.msk [vmem:[%s304] sm:$0xff] %vm435, %v2116
        %2119 = vst.msk [vmem:[%s304 + $0x8] sm:$0xff] %vm435, %v2117
        %s2120 = sand.u32 %s163, 1
        %s2121 = scalar_lea.sflag [#allocation4], %s2120
        %s2122 = sand.u32 %s163, 1
        %s2123 = smul.addr %s2122, 16
        %s2124 = scalar_lea.vmem [#allocation8], %s2123
        // Predicated region
        $region57: #{gpt_neo_self_attention.1} parent=43 // pred_check
          %p2125 = pneg %p173
        $region58: #{gpt_neo_self_attention.1} parent=43 // pred_check_branch
          %2127 = sbr.rel (%p2125) target = $region60
        $region59: #{gpt_neo_self_attention.1} parent=43 // pred_region
          %2129 = vsyncadd %s2121, 0
          %s2130 = smul.addr %s24, 2
          %s2131 = smul.addr %s2130, 8
          %s2132 = scalar_lea.hbm %s6, %s2131
          %s2133 = sshll.u32 %s2124, 4
          %s2134 = int_to_ptr.vmem [resolvable:$true] %s2133
          %s2135 = sshll.u32 %s2132, 4
          %s2136 = int_to_ptr.hbm [resolvable:$true] %s2135
          %2141 = dma.vmem_to_hbm [thread:$0]  %s2134, 256, %s2136, %s2121, 128, 128, 8
        $region60: #{gpt_neo_self_attention.1} parent=43 // pred_fallthru
          _
      $region44: #{gpt_neo_self_attention.1} parent=5 // pred_fallthru
        _
      %p2142 = scmp.le.s32.totalorder 2, %s19
      // Predicated region
      $region61: #{gpt_neo_self_attention.1} parent=5 // pred_check
        %p2143 = pneg %p2142
      $region62: #{gpt_neo_self_attention.1} parent=5 // pred_check_branch
        %2145 = sbr.rel (%p2143) target = $region64
      $region63: #{gpt_neo_self_attention.1} parent=5 // pred_region
        %s2146 = ssub.s32 %s19, 2
        // Predicated region
        $region65: #{gpt_neo_self_attention.1} parent=63 // pred_check
          %p2147 = pneg %p179
        $region66: #{gpt_neo_self_attention.1} parent=63 // pred_check_branch
          %2149 = sbr.rel (%p2147) target = $region68
        $region67: #{gpt_neo_self_attention.1} parent=63 // pred_region
          %s2150 = sand.u32 %s164, 1
          %s2151 = scalar_lea.sflag [#allocation4], %s2150
          %s2152 = sand.u32 %s164, 1
          %s2153 = smul.addr %s2152, 16
          %s2154 = scalar_lea.vmem [#allocation8], %s2153
          %2156 = dma.done %s2151, 256
        $region68: #{gpt_neo_self_attention.1} parent=63 // pred_fallthru
          _
      $region64: #{gpt_neo_self_attention.1} parent=5 // pred_fallthru
        _
    $region6: #{gpt_neo_self_attention.1} parent=1 // loop_footer
      %s23 = sadd.s32 1, %s19
    $region7: #{gpt_neo_self_attention.1} parent=1 // loop_footer_branch
      %18 = sbr.rel target = $region3
    $region8: #{gpt_neo_self_attention.1} parent=1 // loop_exit
      _
    %2157 = vsyncpa [#allocation3], 1
    %s2158 = scalar_lea.sflag [#allocation3], 1
    %2159 = vsyncpa %s2158, 1
    %2160 = vsyncpa [#allocation6], 1
    %2161 = vsyncpa [#allocation4], 1
    %s2162 = scalar_lea.sflag [#allocation4], 1
    %2163 = vsyncpa %s2162, 1

</llo_original>
